<compile_context>
chip_gen: v6e
topology: v6e:2x2x1
jax: 0.10.0
libtpu: 0.0.40
codegen_flags: <defaults>
</compile_context>

<pallas_src>
import functools

import jax
import jax.numpy as jnp
import numpy as np
from jax.experimental import pallas as pl
from jax.experimental.pallas import tpu as pltpu

BN_EPS = 1e-5


def _round_up(x, m):
    return ((x + m - 1) // m) * m


def _compiler_params():
    # Derive the scoped-VMEM budget per generation (v7x only has 64 MiB / core).
    try:
        cap = int(pltpu.get_tpu_info().vmem_capacity_bytes)
    except Exception:
        cap = 64 * 1024 * 1024
    return pltpu.CompilerParams(
        dimension_semantics=("parallel", "parallel"),
        vmem_limit_bytes=min(cap // 2, 64 * 1024 * 1024))


def _pick_tile_h(H, W, ci, co, budget=20 * 1024 * 1024):
    """Largest divisor of H whose per-step VMEM footprint fits `budget`,
    preferring >= 2 H-tiles so the pipeline (and both v7x cores) have work."""
    def vmem_bytes(th):
        x_blk = 2 * (th + 2) * W * ci * 2                      # main + halo inputs (bf16, 2 bufs)
        y_blk = 2 * th * W * co * 2                            # bf16 conv output (2 bufs)
        w_blk = 2 * 9 * ci * co * 2                            # weights (2 bufs)
        scr = (th + 2) * (W + 2) * ci * 2 + (th + 2) * W * 3 * ci * 2
        acc = th * W * co * 4                                  # live f32 accumulator
        return x_blk + y_blk + w_blk + scr + acc

    divisors = [d for d in range(1, H + 1) if H % d == 0]
    fitting = [d for d in divisors if vmem_bytes(d) <= budget] or divisors[:1]
    th = fitting[-1]
    if th == H:
        smaller = [d for d in fitting if d < H]
        if smaller:
            th = smaller[-1]                                    # keep >= 2 tiles when possible
    return th


# --------------------- conv (+ fused input BN/ReLU) + partial BN stats ---------------------
def _conv_bn_stats_kernel(x_ref, top_ref, bot_ref, w_ref, scale_ref, shift_ref,
                          y_ref, s1_ref, s2_ref, hpad_ref, colw_ref,
                          *, fuse_input_bn_relu):
    # x_ref:     (1, TH, W, Ci)   bf16  main rows of this H-tile
    # top_ref:   (1, 1, W, Ci)    bf16  row above the tile (clamped; used when t > 0)
    # bot_ref:   (1, 1, W, Ci)    bf16  row below the tile (clamped; used when t < T-1)
    # w_ref:     (3, 3*Ci, Co)    bf16  per-ky im2col weights, rows ordered (kx, cin)
    # scale_ref: (1, Ci) f32  shift_ref: (1, Ci) f32   previous layer's folded BN affine
    # y_ref:     (1, TH, W, Co)   bf16  raw conv output (pre-BN)
    # s1_ref:    (1, 1, 1, Co)    f32   per-tile sum over pixels
    # s2_ref:    (1, 1, 1, Co)    f32   per-tile sum of squares
    # hpad_ref:  (TH+2, W+2, Ci)  bf16  zero-bordered (optionally BN+ReLU'd) input tile
    # colw_ref:  ((TH+2)*W, 3*Ci) bf16  W-direction im2col scratch
    th_p2, w_p2, ci = hpad_ref.shape
    th, width = th_p2 - 2, w_p2 - 2
    co = w_ref.shape[2]
    t = pl.program_id(1)
    n_t = pl.num_programs(1)

    def _prep(v):
        if fuse_input_bn_relu:
            v = jnp.maximum(v.astype(jnp.float32) * scale_ref[...] + shift_ref[...], 0.0)
        return v.astype(jnp.bfloat16)

    # Zero-bordered halo tile in VMEM (fuses the previous layer's BN+ReLU and the
    # spatial zero padding, so neither ever round-trips through HBM).
    hpad_ref[...] = jnp.zeros((th_p2, w_p2, ci), jnp.bfloat16)
    hpad_ref[1:th + 1, 1:width + 1, :] = _prep(x_ref[0])

    @pl.when(t > 0)
    def _():
        hpad_ref[0, 1:width + 1, :] = _prep(top_ref[0, 0])

    @pl.when(t < n_t - 1)
    def _():
        hpad_ref[th + 1, 1:width + 1, :] = _prep(bot_ref[0, 0])

    # W-direction im2col strip: colw[h*W + x, kx*Ci + c] = hpad[h, x + kx, c].
    for kx in range(3):
        colw_ref[:, kx * ci:(kx + 1) * ci] = (
            hpad_ref[:, kx:kx + width, :].reshape(th_p2 * width, ci))

    # 3 MXU matmuls with contraction K = 3*Ci; each ky tap is a sublane-aligned
    # row offset into colw.  Summed in the f32 accumulator, stored exactly once.
    m = th * width
    acc = jnp.dot(colw_ref[0:m, :], w_ref[0], preferred_element_type=jnp.float32)
    acc = acc + jnp.dot(colw_ref[width:width + m, :], w_ref[1],
                        preferred_element_type=jnp.float32)
    acc = acc + jnp.dot(colw_ref[2 * width:2 * width + m, :], w_ref[2],
                        preferred_element_type=jnp.float32)

    # Exact per-tile BN partial statistics in f32, then a single bf16 store of y.
    s1_ref[0, 0] = jnp.sum(acc, axis=0, keepdims=True)
    s2_ref[0, 0] = jnp.sum(acc * acc, axis=0, keepdims=True)
    y_ref[0] = acc.reshape(th, width, co).astype(y_ref.dtype)


def _conv_bn_stats_pass(x, wk, scale_in, shift_in, *, fuse_input_bn_relu):
    N, H, W, ci = x.shape
    co = wk.shape[2]
    th = _pick_tile_h(H, W, ci, co)
    n_t = H // th

    kernel = functools.partial(_conv_bn_stats_kernel,
                               fuse_input_bn_relu=fuse_input_bn_relu)
    y, s1, s2 = pl.pallas_call(
        kernel,
        out_shape=(jax.ShapeDtypeStruct((N, H, W, co), jnp.bfloat16),
                   jax.ShapeDtypeStruct((N, n_t, 1, co), jnp.float32),
                   jax.ShapeDtypeStruct((N, n_t, 1, co), jnp.float32)),
        grid=(N, n_t),
        in_specs=[
            # main TH rows of the tile
            pl.BlockSpec((1, th, W, ci), lambda n, t: (n, t, 0, 0)),
            # 1-row halos (clamped indices; the kernel ignores them at the image border)
            pl.BlockSpec((1, 1, W, ci),
                         lambda n, t: (n, jnp.maximum(t * th - 1, 0), 0, 0)),
            pl.BlockSpec((1, 1, W, ci),
                         lambda n, t: (n, jnp.minimum((t + 1) * th, H - 1), 0, 0)),
            pl.BlockSpec((3, 3 * ci, co), lambda n, t: (0, 0, 0)),
            pl.BlockSpec((1, ci), lambda n, t: (0, 0)),
            pl.BlockSpec((1, ci), lambda n, t: (0, 0)),
        ],
        out_specs=(
            pl.BlockSpec((1, th, W, co), lambda n, t: (n, t, 0, 0)),
            pl.BlockSpec((1, 1, 1, co), lambda n, t: (n, t, 0, 0)),
            pl.BlockSpec((1, 1, 1, co), lambda n, t: (n, t, 0, 0)),
        ),
        scratch_shapes=[pltpu.VMEM((th + 2, W + 2, ci), jnp.bfloat16),
                        pltpu.VMEM(((th + 2) * W, 3 * ci), jnp.bfloat16)],
        compiler_params=_compiler_params(),
    )(x, x, x, wk, scale_in, shift_in)
    return y, s1, s2


# --------------------------- final BN + ReLU (lane-dense store) ---------------------------
def _bn_relu_kernel(y_ref, scale_ref, shift_ref, o_ref):
    y = y_ref[0].astype(jnp.float32)
    o_ref[0] = jnp.maximum(y * scale_ref[...] + shift_ref[...], 0.0).astype(o_ref.dtype)


def _bn_relu_pass(y, scale, shift, *, out_dtype):
    N, H, W, co = y.shape
    th = _pick_tile_h(H, W, co, co)
    n_t = H // th
    return pl.pallas_call(
        _bn_relu_kernel,
        out_shape=jax.ShapeDtypeStruct((N, H, W, co), out_dtype),
        grid=(N, n_t),
        in_specs=[pl.BlockSpec((1, th, W, co), lambda n, t: (n, t, 0, 0)),
                  pl.BlockSpec((1, co), lambda n, t: (0, 0)),
                  pl.BlockSpec((1, co), lambda n, t: (0, 0))],
        out_specs=pl.BlockSpec((1, th, W, co), lambda n, t: (n, t, 0, 0)),
        compiler_params=_compiler_params(),
    )(y, scale, shift)


# --------------------------- parameter packing / BN folding ---------------------------
def _pack_weights(w_hwio, ci_p, co_p):
    _, _, ci, co = w_hwio.shape
    wp = jnp.zeros((3, 3, ci_p, co_p), jnp.float32).at[:, :, :ci, :co].set(
        w_hwio.astype(jnp.float32))
    return wp.reshape(3, 3 * ci_p, co_p).astype(jnp.bfloat16)   # rows ordered (kx, cin)


def _pad_channels(v, c_p):
    return jnp.zeros((c_p,), jnp.float32).at[:v.shape[0]].set(v.astype(jnp.float32))


def _fold_bn(s1, s2, gamma_p, beta_p, count):
    # Exact batch statistics from the per-tile partial sums (tiny XLA reduction),
    # folded with gamma/beta into a per-channel scale/shift (biased variance,
    # as in PyTorch training-mode BatchNorm normalization).
    mean = jnp.sum(s1, axis=(0, 1, 2)) / count
    ex2 = jnp.sum(s2, axis=(0, 1, 2)) / count
    var = jnp.maximum(ex2 - mean * mean, 0.0)
    inv_std = jax.lax.rsqrt(var + BN_EPS)
    scale = gamma_p * inv_std
    shift = beta_p - mean * scale
    return scale.reshape(1, -1), shift.reshape(1, -1)


# --------------------------- full module forward (NCHW in/out) ---------------------------
def conv_module_forward(x_nchw, params):
    N, Cin, H, W = x_nchw.shape
    Cout = params["w1"].shape[-1]
    Cpi = _round_up(Cin, 128)
    Cpo = _round_up(Cout, 128)

    x = jnp.transpose(x_nchw, (0, 2, 3, 1))                             # NCHW -> NHWC
    x = jnp.pad(x, ((0, 0), (0, 0), (0, 0), (0, Cpi - Cin))).astype(jnp.bfloat16)

    w1k = _pack_weights(params["w1"], Cpi, Cpo)
    w2k = _pack_weights(params["w2"], Cpo, Cpo)
    g1p, be1p = _pad_channels(params["g1"], Cpo), _pad_channels(params["be1"], Cpo)
    g2p, be2p = _pad_channels(params["g2"], Cpo), _pad_channels(params["be2"], Cpo)

    count = jnp.float32(N * H * W)
    ident_scale = jnp.ones((1, Cpi), jnp.float32)
    ident_shift = jnp.zeros((1, Cpi), jnp.float32)

    # NOTE: conv biases b1/b2 are intentionally not applied: a per-channel bias
    # ahead of training-mode BatchNorm is a mathematical no-op (the batch mean
    # absorbs it and the variance is unchanged), so the output is identical.

    # Block 1: conv1 + per-tile BN statistics.
    y1, s1a, s2a = _conv_bn_stats_pass(x, w1k, ident_scale, ident_shift,
                                       fuse_input_bn_relu=False)
    scale1, shift1 = _fold_bn(s1a, s2a, g1p, be1p, count)

    # Block 2: BN1+ReLU1 (and the spatial zero-pad) fused into the conv2 pass.
    y2, s1b, s2b = _conv_bn_stats_pass(y1, w2k, scale1, shift1,
                                       fuse_input_bn_relu=True)
    scale2, shift2 = _fold_bn(s1b, s2b, g2p, be2p, count)

    # Final BN2 + ReLU2.
    out = _bn_relu_pass(y2, scale2, shift2, out_dtype=x_nchw.dtype)     # (N,H,W,Cpo)
    return jnp.transpose(out[..., :Cout], (0, 3, 1, 2))                 # NHWC -> NCHW


# ----------------------------- reference (plain JAX, with biases) -----------------------------
def _ref_block(x, w, b, gamma, beta):
    y = jax.lax.conv_general_dilated(
        x, w, window_strides=(1, 1), padding="SAME",
        dimension_numbers=("NHWC", "HWIO", "NHWC")) + b.reshape(1, 1, 1, -1)
    mean = y.mean(axis=(0, 1, 2), keepdims=True)
    var = ((y - mean) ** 2).mean(axis=(0, 1, 2), keepdims=True)
    y = (y - mean) * jax.lax.rsqrt(var + BN_EPS) * gamma.reshape(1, 1, 1, -1) \
        + beta.reshape(1, 1, 1, -1)
    return jnp.maximum(y, 0.0)


def _ref_forward(x_nchw, p):
    x = jnp.transpose(x_nchw, (0, 2, 3, 1))
    y = _ref_block(x, p["w1"], p["b1"], p["g1"], p["be1"])
    y = _ref_block(y, p["w2"], p["b2"], p["g2"], p["be2"])
    return jnp.transpose(y, (0, 3, 1, 2))


if __name__ == "__main__":
    # Small shapes consistent with the module: batch=2, in_feat=4, out_feat=8, 16x16 spatial.
    N, Cin, Cout, H, W = 2, 4, 8, 16, 16

    key = jax.random.PRNGKey(0)
    kx, kw1, kb1, kw2, kb2 = jax.random.split(key, 5)

    x = jax.random.normal(kx, (N, Cin, H, W), dtype=jnp.float32)  # NCHW, like PyTorch

    params = {
        "w1": 0.1 * jax.random.normal(kw1, (3, 3, Cin, Cout), dtype=jnp.float32),
        "b1": 0.1 * jax.random.normal(kb1, (Cout,), dtype=jnp.float32),
        "g1": jnp.ones((Cout,), jnp.float32),    # BatchNorm default init
        "be1": jnp.zeros((Cout,), jnp.float32),
        "w2": 0.1 * jax.random.normal(kw2, (3, 3, Cout, Cout), dtype=jnp.float32),
        "b2": 0.1 * jax.random.normal(kb2, (Cout,), dtype=jnp.float32),
        "g2": jnp.ones((Cout,), jnp.float32),
        "be2": jnp.zeros((Cout,), jnp.float32),
    }

    out = jax.block_until_ready(conv_module_forward(x, params))
    assert out.shape == (N, Cout, H, W), out.shape

    ref = jax.block_until_ready(_ref_forward(x, params))
    # bf16 MXU path with bf16 intermediates -> slightly looser tolerance.
    np.testing.assert_allclose(np.asarray(out), np.asarray(ref), atol=3e-2, rtol=3e-2)

    print("KERNEL_OK")
</pallas_src>

<mosaic_0001>
module attributes {stable_mosaic.version = 11 : i64} {
  func.func @_conv_bn_stats_kernel(%arg0: i32, %arg1: i32, %arg2: memref<1x8x16x128xbf16, #tpu.memory_space<vmem>>, %arg3: memref<1x1x16x128xbf16, #tpu.memory_space<vmem>>, %arg4: memref<1x1x16x128xbf16, #tpu.memory_space<vmem>>, %arg5: memref<3x384x128xbf16, #tpu.memory_space<vmem>>, %arg6: memref<1x128xf32, #tpu.memory_space<vmem>>, %arg7: memref<1x128xf32, #tpu.memory_space<vmem>>, %arg8: memref<1x8x16x128xbf16, #tpu.memory_space<vmem>>, %arg9: memref<1x1x1x128xf32, #tpu.memory_space<vmem>>, %arg10: memref<1x1x1x128xf32, #tpu.memory_space<vmem>>, %arg11: memref<10x18x128xbf16, #tpu.memory_space<vmem>>, %arg12: memref<160x384xbf16, #tpu.memory_space<vmem>>) attributes {dimension_semantics = [#tpu.dimension_semantics<parallel>, #tpu.dimension_semantics<parallel>], iteration_bounds = array<i64: 2, 2>, scalar_prefetch = 0 : i64, scratch_operands = 2 : i64, tpu.core_type = #tpu.core_type<tc>, window_params = [{transform_indices = @transform_0, window_bounds = array<i64: 1, 8, 16, 128>}, {transform_indices = @transform_1, window_bounds = array<i64: 1, 1, 16, 128>}, {transform_indices = @transform_2, window_bounds = array<i64: 1, 1, 16, 128>}, {pipeline_mode = #tpu.pipeline_mode<synchronous>, transform_indices = @transform_3, window_bounds = array<i64: 3, 384, 128>}, {pipeline_mode = #tpu.pipeline_mode<synchronous>, transform_indices = @transform_4, window_bounds = array<i64: 1, 128>}, {pipeline_mode = #tpu.pipeline_mode<synchronous>, transform_indices = @transform_5, window_bounds = array<i64: 1, 128>}, {transform_indices = @transform_6, window_bounds = array<i64: 1, 8, 16, 128>}, {transform_indices = @transform_7, window_bounds = array<i64: 1, 1, 1, 128>}, {transform_indices = @transform_8, window_bounds = array<i64: 1, 1, 1, 128>}]} {
    %cst = arith.constant 0.000000e+00 : bf16
    %0 = vector.broadcast %cst : bf16 to vector<10x18x128xbf16>
    %c0 = arith.constant 0 : index
    %c0_0 = arith.constant 0 : index
    %c0_1 = arith.constant 0 : index
    %1 = vector.load %arg11[%c0, %c0_0, %c0_1] : memref<10x18x128xbf16, #tpu.memory_space<vmem>>, vector<10x18x128xbf16>
    tpu.vector_store %arg11[%c0, %c0_0, %c0_1], %0 {strides = array<i32>} : memref<10x18x128xbf16, #tpu.memory_space<vmem>>, vector<10x18x128xbf16>,
    %c0_2 = arith.constant 0 : index
    %c0_3 = arith.constant 0 : index
    %c0_4 = arith.constant 0 : index
    %c0_5 = arith.constant 0 : index
    %2 = vector.load %arg2[%c0_2, %c0_3, %c0_4, %c0_5] : memref<1x8x16x128xbf16, #tpu.memory_space<vmem>>, vector<1x8x16x128xbf16>
    %3 = vector.shape_cast %2 : vector<1x8x16x128xbf16> to vector<8x16x128xbf16>
    %c1 = arith.constant 1 : index
    %c1_6 = arith.constant 1 : index
    %c0_7 = arith.constant 0 : index
    %4 = vector.load %arg11[%c1, %c1_6, %c0_7] : memref<10x18x128xbf16, #tpu.memory_space<vmem>>, vector<8x16x128xbf16>
    tpu.vector_store %arg11[%c1, %c1_6, %c0_7], %3 {strides = array<i32>} : memref<10x18x128xbf16, #tpu.memory_space<vmem>>, vector<8x16x128xbf16>,
    %c0_i32 = arith.constant 0 : i32
    %5 = arith.cmpi sgt, %arg1, %c0_i32 : i32
    %6 = arith.extui %5 : i1 to i32
    %c0_i32_8 = arith.constant 0 : i32
    %7 = arith.cmpi ne, %6, %c0_i32_8 : i32
    scf.if %7 {
      %c0_52 = arith.constant 0 : index
      %c0_53 = arith.constant 0 : index
      %c0_54 = arith.constant 0 : index
      %c0_55 = arith.constant 0 : index
      %50 = vector.load %arg3[%c0_52, %c0_53, %c0_54, %c0_55] : memref<1x1x16x128xbf16, #tpu.memory_space<vmem>>, vector<1x1x16x128xbf16>
      %51 = vector.shape_cast %50 : vector<1x1x16x128xbf16> to vector<16x128xbf16>
      %c0_56 = arith.constant 0 : index
      %c1_57 = arith.constant 1 : index
      %c0_58 = arith.constant 0 : index
      %52 = vector.load %arg11[%c0_56, %c1_57, %c0_58] : memref<10x18x128xbf16, #tpu.memory_space<vmem>>, vector<1x16x128xbf16>
      %53 = vector.shape_cast %52 : vector<1x16x128xbf16> to vector<16x128xbf16>
      %54 = vector.shape_cast %51 : vector<16x128xbf16> to vector<1x16x128xbf16>
      tpu.vector_store %arg11[%c0_56, %c1_57, %c0_58], %54 {strides = array<i32>} : memref<10x18x128xbf16, #tpu.memory_space<vmem>>, vector<1x16x128xbf16>,
    } else {
    }
    %c1_i32 = arith.constant 1 : i32
    %8 = arith.cmpi slt, %arg1, %c1_i32 : i32
    %9 = arith.extui %8 : i1 to i32
    %c0_i32_9 = arith.constant 0 : i32
    %10 = arith.cmpi ne, %9, %c0_i32_9 : i32
    scf.if %10 {
      %c0_52 = arith.constant 0 : index
      %c0_53 = arith.constant 0 : index
      %c0_54 = arith.constant 0 : index
      %c0_55 = arith.constant 0 : index
      %50 = vector.load %arg4[%c0_52, %c0_53, %c0_54, %c0_55] : memref<1x1x16x128xbf16, #tpu.memory_space<vmem>>, vector<1x1x16x128xbf16>
      %51 = vector.shape_cast %50 : vector<1x1x16x128xbf16> to vector<16x128xbf16>
      %c9 = arith.constant 9 : index
      %c1_56 = arith.constant 1 : index
      %c0_57 = arith.constant 0 : index
      %52 = vector.load %arg11[%c9, %c1_56, %c0_57] : memref<10x18x128xbf16, #tpu.memory_space<vmem>>, vector<1x16x128xbf16>
      %53 = vector.shape_cast %52 : vector<1x16x128xbf16> to vector<16x128xbf16>
      %54 = vector.shape_cast %51 : vector<16x128xbf16> to vector<1x16x128xbf16>
      tpu.vector_store %arg11[%c9, %c1_56, %c0_57], %54 {strides = array<i32>} : memref<10x18x128xbf16, #tpu.memory_space<vmem>>, vector<1x16x128xbf16>,
    } else {
    }
    %c0_10 = arith.constant 0 : index
    %c0_11 = arith.constant 0 : index
    %c0_12 = arith.constant 0 : index
    %11 = vector.load %arg11[%c0_10, %c0_11, %c0_12] : memref<10x18x128xbf16, #tpu.memory_space<vmem>>, vector<10x16x128xbf16>
    %12 = vector.shape_cast %11 : vector<10x16x128xbf16> to vector<160x128xbf16>
    %c0_13 = arith.constant 0 : index
    %c0_14 = arith.constant 0 : index
    %13 = vector.load %arg12[%c0_13, %c0_14] : memref<160x384xbf16, #tpu.memory_space<vmem>>, vector<160x128xbf16>
    tpu.vector_store %arg12[%c0_13, %c0_14], %12 {strides = array<i32>} : memref<160x384xbf16, #tpu.memory_space<vmem>>, vector<160x128xbf16>,
    %c0_15 = arith.constant 0 : index
    %c1_16 = arith.constant 1 : index
    %c0_17 = arith.constant 0 : index
    %14 = vector.load %arg11[%c0_15, %c1_16, %c0_17] : memref<10x18x128xbf16, #tpu.memory_space<vmem>>, vector<10x16x128xbf16>
    %15 = vector.shape_cast %14 : vector<10x16x128xbf16> to vector<160x128xbf16>
    %c0_18 = arith.constant 0 : index
    %c128 = arith.constant 128 : index
    %16 = vector.load %arg12[%c0_18, %c128] : memref<160x384xbf16, #tpu.memory_space<vmem>>, vector<160x128xbf16>
    tpu.vector_store %arg12[%c0_18, %c128], %15 {strides = array<i32>} : memref<160x384xbf16, #tpu.memory_space<vmem>>, vector<160x128xbf16>,
    %c0_19 = arith.constant 0 : index
    %c2 = arith.constant 2 : index
    %c0_20 = arith.constant 0 : index
    %17 = vector.load %arg11[%c0_19, %c2, %c0_20] : memref<10x18x128xbf16, #tpu.memory_space<vmem>>, vector<10x16x128xbf16>
    %18 = vector.shape_cast %17 : vector<10x16x128xbf16> to vector<160x128xbf16>
    %c0_21 = arith.constant 0 : index
    %c256 = arith.constant 256 : index
    %19 = vector.load %arg12[%c0_21, %c256] : memref<160x384xbf16, #tpu.memory_space<vmem>>, vector<160x128xbf16>
    tpu.vector_store %arg12[%c0_21, %c256], %18 {strides = array<i32>} : memref<160x384xbf16, #tpu.memory_space<vmem>>, vector<160x128xbf16>,
    %c0_22 = arith.constant 0 : index
    %c0_23 = arith.constant 0 : index
    %20 = vector.load %arg12[%c0_22, %c0_23] : memref<160x384xbf16, #tpu.memory_space<vmem>>, vector<128x384xbf16>
    %c0_24 = arith.constant 0 : index
    %c0_25 = arith.constant 0 : index
    %c0_26 = arith.constant 0 : index
    %21 = vector.load %arg5[%c0_24, %c0_25, %c0_26] : memref<3x384x128xbf16, #tpu.memory_space<vmem>>, vector<1x384x128xbf16>
    %22 = vector.shape_cast %21 : vector<1x384x128xbf16> to vector<384x128xbf16>
    %cst_27 = arith.constant dense<0.000000e+00> : vector<128x128xf32>
    %23 = tpu.matmul %20, %22, %cst_27 {dimension_numbers = #tpu.dot_dimension_numbers<[1], [0], [0], [1], [0, 0, 1, 1], [], []>} : vector<128x384xbf16>, vector<384x128xbf16>, vector<128x128xf32> -> vector<128x128xf32>
    %c16 = arith.constant 16 : index
    %c0_28 = arith.constant 0 : index
    %24 = vector.load %arg12[%c16, %c0_28] : memref<160x384xbf16, #tpu.memory_space<vmem>>, vector<128x384xbf16>
    %c1_29 = arith.constant 1 : index
    %c0_30 = arith.constant 0 : index
    %c0_31 = arith.constant 0 : index
    %25 = vector.load %arg5[%c1_29, %c0_30, %c0_31] : memref<3x384x128xbf16, #tpu.memory_space<vmem>>, vector<1x384x128xbf16>
    %26 = vector.shape_cast %25 : vector<1x384x128xbf16> to vector<384x128xbf16>
    %cst_32 = arith.constant dense<0.000000e+00> : vector<128x128xf32>
    %27 = tpu.matmul %24, %26, %cst_32 {dimension_numbers = #tpu.dot_dimension_numbers<[1], [0], [0], [1], [0, 0, 1, 1], [], []>} : vector<128x384xbf16>, vector<384x128xbf16>, vector<128x128xf32> -> vector<128x128xf32>
    %28 = arith.addf %23, %27 : vector<128x128xf32>
    %c32 = arith.constant 32 : index
    %c0_33 = arith.constant 0 : index
    %29 = vector.load %arg12[%c32, %c0_33] : memref<160x384xbf16, #tpu.memory_space<vmem>>, vector<128x384xbf16>
    %c2_34 = arith.constant 2 : index
    %c0_35 = arith.constant 0 : index
    %c0_36 = arith.constant 0 : index
    %30 = vector.load %arg5[%c2_34, %c0_35, %c0_36] : memref<3x384x128xbf16, #tpu.memory_space<vmem>>, vector<1x384x128xbf16>
    %31 = vector.shape_cast %30 : vector<1x384x128xbf16> to vector<384x128xbf16>
    %cst_37 = arith.constant dense<0.000000e+00> : vector<128x128xf32>
    %32 = tpu.matmul %29, %31, %cst_37 {dimension_numbers = #tpu.dot_dimension_numbers<[1], [0], [0], [1], [0, 0, 1, 1], [], []>} : vector<128x384xbf16>, vector<384x128xbf16>, vector<128x128xf32> -> vector<128x128xf32>
    %33 = arith.addf %28, %32 : vector<128x128xf32>
    %cst_38 = arith.constant dense<0.000000e+00> : vector<128xf32>
    %34 = vector.multi_reduction <add>, %33, %cst_38 [0] : vector<128x128xf32> to vector<128xf32>
    %35 = vector.shape_cast %34 : vector<128xf32> to vector<1x128xf32>
    %c0_39 = arith.constant 0 : index
    %c0_40 = arith.constant 0 : index
    %c0_41 = arith.constant 0 : index
    %c0_42 = arith.constant 0 : index
    %36 = vector.load %arg9[%c0_39, %c0_40, %c0_41, %c0_42] : memref<1x1x1x128xf32, #tpu.memory_space<vmem>>, vector<1x1x1x128xf32>
    %37 = vector.shape_cast %36 : vector<1x1x1x128xf32> to vector<1x128xf32>
    %38 = vector.shape_cast %35 : vector<1x128xf32> to vector<1x1x1x128xf32>
    tpu.vector_store %arg9[%c0_39, %c0_40, %c0_41, %c0_42], %38 {strides = array<i32>} : memref<1x1x1x128xf32, #tpu.memory_space<vmem>>, vector<1x1x1x128xf32>,
    %39 = arith.mulf %33, %33 : vector<128x128xf32>
    %cst_43 = arith.constant dense<0.000000e+00> : vector<128xf32>
    %40 = vector.multi_reduction <add>, %39, %cst_43 [0] : vector<128x128xf32> to vector<128xf32>
    %41 = vector.shape_cast %40 : vector<128xf32> to vector<1x128xf32>
    %c0_44 = arith.constant 0 : index
    %c0_45 = arith.constant 0 : index
    %c0_46 = arith.constant 0 : index
    %c0_47 = arith.constant 0 : index
    %42 = vector.load %arg10[%c0_44, %c0_45, %c0_46, %c0_47] : memref<1x1x1x128xf32, #tpu.memory_space<vmem>>, vector<1x1x1x128xf32>
    %43 = vector.shape_cast %42 : vector<1x1x1x128xf32> to vector<1x128xf32>
    %44 = vector.shape_cast %41 : vector<1x128xf32> to vector<1x1x1x128xf32>
    tpu.vector_store %arg10[%c0_44, %c0_45, %c0_46, %c0_47], %44 {strides = array<i32>} : memref<1x1x1x128xf32, #tpu.memory_space<vmem>>, vector<1x1x1x128xf32>,
    %45 = vector.shape_cast %33 : vector<128x128xf32> to vector<8x16x128xf32>
    %46 = arith.truncf %45 : vector<8x16x128xf32> to vector<8x16x128xbf16>
    %c0_48 = arith.constant 0 : index
    %c0_49 = arith.constant 0 : index
    %c0_50 = arith.constant 0 : index
    %c0_51 = arith.constant 0 : index
    %47 = vector.load %arg8[%c0_48, %c0_49, %c0_50, %c0_51] : memref<1x8x16x128xbf16, #tpu.memory_space<vmem>>, vector<1x8x16x128xbf16>
    %48 = vector.shape_cast %47 : vector<1x8x16x128xbf16> to vector<8x16x128xbf16>
    %49 = vector.shape_cast %46 : vector<8x16x128xbf16> to vector<1x8x16x128xbf16>
    tpu.vector_store %arg8[%c0_48, %c0_49, %c0_50, %c0_51], %49 {strides = array<i32>} : memref<1x8x16x128xbf16, #tpu.memory_space<vmem>>, vector<1x8x16x128xbf16>,
    return
  }
  func.func @transform_0(%arg0: i32, %arg1: i32) -> (i32, i32, i32, i32) {
    %c0_i32 = arith.constant 0 : i32
    %c0_i32_0 = arith.constant 0 : i32
    %c0_i32_1 = arith.constant 0 : i32
    return %arg0, %arg1, %c0_i32, %c0_i32_0 : i32, i32, i32, i32
  }
  func.func @transform_1(%arg0: i32, %arg1: i32) -> (i32, i32, i32, i32) {
    %c8_i32 = arith.constant 8 : i32
    %0 = arith.muli %arg1, %c8_i32 : i32
    %c1_i32 = arith.constant 1 : i32
    %1 = arith.subi %0, %c1_i32 : i32
    %c0_i32 = arith.constant 0 : i32
    %2 = arith.maxsi %1, %c0_i32 : i32
    %c0_i32_0 = arith.constant 0 : i32
    %c0_i32_1 = arith.constant 0 : i32
    %c0_i32_2 = arith.constant 0 : i32
    return %arg0, %2, %c0_i32_0, %c0_i32_1 : i32, i32, i32, i32
  }
  func.func @transform_2(%arg0: i32, %arg1: i32) -> (i32, i32, i32, i32) {
    %c1_i32 = arith.constant 1 : i32
    %0 = arith.addi %arg1, %c1_i32 : i32
    %c8_i32 = arith.constant 8 : i32
    %1 = arith.muli %0, %c8_i32 : i32
    %c15_i32 = arith.constant 15 : i32
    %2 = arith.minsi %1, %c15_i32 : i32
    %c0_i32 = arith.constant 0 : i32
    %c0_i32_0 = arith.constant 0 : i32
    %c0_i32_1 = arith.constant 0 : i32
    return %arg0, %2, %c0_i32, %c0_i32_0 : i32, i32, i32, i32
  }
  func.func @transform_3(%arg0: i32, %arg1: i32) -> (i32, i32, i32) {
    %c0_i32 = arith.constant 0 : i32
    %c0_i32_0 = arith.constant 0 : i32
    %c0_i32_1 = arith.constant 0 : i32
    %c0_i32_2 = arith.constant 0 : i32
    return %c0_i32, %c0_i32_0, %c0_i32_1 : i32, i32, i32
  }
  func.func @transform_4(%arg0: i32, %arg1: i32) -> (i32, i32) {
    %c0_i32 = arith.constant 0 : i32
    %c0_i32_0 = arith.constant 0 : i32
    %c0_i32_1 = arith.constant 0 : i32
    return %c0_i32, %c0_i32_0 : i32, i32
  }
  func.func @transform_5(%arg0: i32, %arg1: i32) -> (i32, i32) {
    %c0_i32 = arith.constant 0 : i32
    %c0_i32_0 = arith.constant 0 : i32
    %c0_i32_1 = arith.constant 0 : i32
    return %c0_i32, %c0_i32_0 : i32, i32
  }
  func.func @transform_6(%arg0: i32, %arg1: i32) -> (i32, i32, i32, i32) {
    %c0_i32 = arith.constant 0 : i32
    %c0_i32_0 = arith.constant 0 : i32
    %c0_i32_1 = arith.constant 0 : i32
    return %arg0, %arg1, %c0_i32, %c0_i32_0 : i32, i32, i32, i32
  }
  func.func @transform_7(%arg0: i32, %arg1: i32) -> (i32, i32, i32, i32) {
    %c0_i32 = arith.constant 0 : i32
    %c0_i32_0 = arith.constant 0 : i32
    %c0_i32_1 = arith.constant 0 : i32
    return %arg0, %arg1, %c0_i32, %c0_i32_0 : i32, i32, i32, i32
  }
  func.func @transform_8(%arg0: i32, %arg1: i32) -> (i32, i32, i32, i32) {
    %c0_i32 = arith.constant 0 : i32
    %c0_i32_0 = arith.constant 0 : i32
    %c0_i32_1 = arith.constant 0 : i32
    return %arg0, %arg1, %c0_i32, %c0_i32_0 : i32, i32, i32, i32
  }
}

</mosaic_0001>

<llo_original>
// kernel: tpu_custom_call.1
$region0: #{tpu_custom_call.1}
  #allocation0 [shape = 'u32[]', space=smem, size = 0x4, offset = 0x4, fixed_abs, tag = 'smem constant byte address 0x4 - core index']
  #allocation1 [shape = 'u32[144,128]{1,0:T(1,128)}', space=vmem, size = 0x12000, scoped, tag = 'internal scratch']
  #allocation2 [shape = 'bf16[10,18,128]{2,1,0:T(8,128)(2,1)}', space=vmem, size = 0xf000, scoped, tag = 'scratch operand']
  #allocation3 [shape = 'bf16[160,384]{1,0:T(8,128)(2,1)}', space=vmem, size = 0x1e000, scoped, tag = 'scratch operand']
  %s0 = inlined_call_operand.hbm [shape: bf16[2,16,16,128], index: 0, kind: input, shape index: {}]
  %s1 = inlined_call_operand.hbm [shape: bf16[2,16,16,128], index: 1, kind: input, shape index: {}]
  %s2 = inlined_call_operand.hbm [shape: bf16[2,16,16,128], index: 2, kind: input, shape index: {}]
  %s3 = inlined_call_operand.hbm [shape: bf16[3,384,128], index: 3, kind: input, shape index: {}]
  %s4 = inlined_call_operand.vmem [shape: f32[1,128], index: 4, kind: input, shape index: {}]
  %s5 = inlined_call_operand.vmem [shape: f32[1,128], index: 5, kind: input, shape index: {}]
  %s6 = inlined_call_operand.hbm [shape: bf16[2,16,16,128], index: 6, kind: output, shape index: {0}]
  %s7 = inlined_call_operand.hbm [shape: f32[2,2,1,128], index: 7, kind: output, shape index: {1}]
  %s8 = inlined_call_operand.hbm [shape: f32[2,2,1,128], index: 8, kind: output, shape index: {2}]
  %9 = xla_tuple %s6, %s7, %s8
  %s10 = sld [smem:[#allocation0]]
  $region97: #{tpu_custom_call.1} parent=0
    _
  %s12 = ssub.s32 1, %s10
  %s13 = scalar_select 0, %s12, %s10
  $region1: #{tpu_custom_call.1} parent=0
    #allocation4 [shape = 'u8[65536]{0}', space=vmem, size = 0x10000, scoped, tag = 'input window, operand 0']
    #allocation5 [shape = 's32[2]{0}', space=sflag, size = 0x8, scoped, tag = 'scoped memory for tpu_custom_call.1']
    #allocation6 [shape = 's32[2]{0}', space=sflag, size = 0x8, scoped, tag = 'scoped memory for tpu_custom_call.1']
    #allocation7 [shape = 'u8[8192]{0}', space=vmem, size = 0x2000, scoped, tag = 'input window, operand 1']
    #allocation8 [shape = 's32[2]{0}', space=sflag, size = 0x8, scoped, tag = 'scoped memory for tpu_custom_call.1']
    #allocation9 [shape = 'u8[8192]{0}', space=vmem, size = 0x2000, scoped, tag = 'input window, operand 2']
    #allocation10 [shape = 'u8[294912]{0}', space=vmem, size = 0x48000, scoped, tag = 'input window, operand 3, single buffered']
    #allocation11 [shape = 's32[1]{0}', space=sflag, size = 0x4, scoped, tag = 'scoped memory for tpu_custom_call.1']
    #allocation12 [shape = 'u8[65536]{0}', space=vmem, size = 0x10000, scoped, tag = 'output window, operand 0']
    #allocation13 [shape = 'u8[1024]{0}', space=vmem, size = 0x400, scoped, tag = 'output window, operand 1']
    #allocation14 [shape = 's32[2]{0}', space=sflag, size = 0x8, scoped, tag = 'scoped memory for tpu_custom_call.1']
    #allocation15 [shape = 'u8[1024]{0}', space=vmem, size = 0x400, scoped, tag = 'output window, operand 2']
    %14 = vsyncpa [#allocation5], 0
    %s15 = scalar_lea.sflag [#allocation5], 1
    %16 = vsyncpa %s15, 0
    %17 = vsyncpa [#allocation8], 0
    %s18 = scalar_lea.sflag [#allocation8], 1
    %19 = vsyncpa %s18, 0
    %20 = vsyncpa [#allocation11], 0
    %21 = vsyncpa [#allocation6], 0
    %s22 = scalar_lea.sflag [#allocation6], 1
    %23 = vsyncpa %s22, 0
    %24 = vsyncpa [#allocation14], 0
    %s25 = scalar_lea.sflag [#allocation14], 1
    %26 = vsyncpa %s25, 0
    loop: start=0, step=1, limit=6
    $region2: #{tpu_custom_call.1} parent=1 // loop_pre_header
      _
    $region3: #{tpu_custom_call.1} parent=1 // loop_header
      %s28 = sphi 0, %s32
      %p29 = scmp.ge.s32.totalorder %s28, 6
      %s35 = sphi 0, %s47
      %s36 = sphi 0, %s43
      %s37 = sphi 0, %s35
      %s38 = sphi 0, %s36
      %s39 = sphi 0, %s37
      %s40 = sphi 0, %s38
      %s52 = sphi 0, %s54
      %s55 = sphi 0, %s52
      %s56 = sphi 0, %s55
      %s72 = sphi 0, %s56
      %s88 = sphi 0, %s90
      %s91 = sphi 0, %s88
      %s92 = sphi 0, %s91
      %s108 = sphi 0, %s92
      %s124 = sphi 0, %s126
      %s127 = sphi 0, %s124
      %s128 = sphi 0, %s127
      %s144 = sphi 0, %s128
      %s148 = sphi 0, %s148
      %s150 = sphi 0, %s148
      %s151 = sphi 0, %s150
      %s165 = sphi 0, %s151
      %s169 = sphi 0, %s169
      %s171 = sphi 0, %s169
      %s172 = sphi 0, %s171
      %s186 = sphi 0, %s172
      %s190 = sphi 0, %s190
      %s192 = sphi 0, %s190
      %s193 = sphi 0, %s192
      %s207 = sphi 0, %s193
      %s215 = sphi 0, %s217
      %s218 = sphi 0, %s215
      %s219 = sphi 0, %s218
      %s235 = sphi 0, %s219
      %s243 = sphi 0, %s245
      %s246 = sphi 0, %s243
      %s247 = sphi 0, %s246
      %s263 = sphi 0, %s247
      %s271 = sphi 0, %s273
      %s274 = sphi 0, %s271
      %s275 = sphi 0, %s274
      %s291 = sphi 0, %s275
    $region4: #{tpu_custom_call.1} parent=1 // loop_header_branch
      %31 = sbr.rel (%p29) target = $region8
    $region5: #{tpu_custom_call.1} parent=1 // loop_body
      %s33 = ssub.s32 %s28, 1
      %s34 = ssub.s32 %s28, 2
      %s41 = sadd.s32 1, %s36
      %p42 = scmp.ge.s32.totalorder %s41, 2
      %s43 = scalar_select %p42, 0, %s41
      %s44 = sadd.s32 1, %s35
      %s45 = scalar_select %p42, %s44, %s35
      %p46 = scmp.ge.s32.totalorder %s45, 2
      %s47 = scalar_select %p46, 0, %s45
      %s48 = ssub.s32 %s35, %s47
      %s49 = ssub.s32 %s36, %s43
      %s50 = sor.u32 %s48, %s49
      %p51 = scmp.eq.s32.totalorder %s50, 0
      %s53 = sadd.s32 %s52, 1
      %s54 = scalar_select %p51, %s52, %s53
      %p57 = pneg %p51
      %p58 = scmp.eq.s32.totalorder %s28, 3
      %p59 = por %p57, %p58
      %p60 = scmp.ne.s32.totalorder %s52, %s55
      %p61 = scmp.eq.s32.totalorder %s28, 0
      %p62 = por %p60, %p61
      %p63 = scmp.ne.s32.totalorder %s52, %s55
      %p64 = scmp.eq.s32.totalorder %s33, 3
      %p65 = por %p63, %p64
      %p66 = scmp.ne.s32.totalorder %s55, %s56
      %p67 = scmp.eq.s32.totalorder %s33, 0
      %p68 = por %p66, %p67
      %p69 = scmp.ne.s32.totalorder %s55, %s56
      %p70 = scmp.eq.s32.totalorder %s34, 3
      %p71 = por %p69, %p70
      %p73 = scmp.ne.s32.totalorder %s56, %s72
      %p74 = scmp.eq.s32.totalorder %s34, 0
      %p75 = por %p73, %p74
      %s76 = smul.u32 %s36, 8
      %s77 = ssub.s32 %s76, 1
      %p78 = scmp.gt.s32.totalorder %s77, 0
      %s79 = scalar_select %p78, %s77, 0
      %s80 = smul.u32 %s43, 8
      %s81 = ssub.s32 %s80, 1
      %p82 = scmp.gt.s32.totalorder %s81, 0
      %s83 = scalar_select %p82, %s81, 0
      %s84 = ssub.s32 %s35, %s47
      %s85 = ssub.s32 %s79, %s83
      %s86 = sor.u32 %s84, %s85
      %p87 = scmp.eq.s32.totalorder %s86, 0
      %s89 = sadd.s32 %s88, 1
      %s90 = scalar_select %p87, %s88, %s89
      %p93 = pneg %p87
      %p94 = scmp.eq.s32.totalorder %s28, 3
      %p95 = por %p93, %p94
      %p96 = scmp.ne.s32.totalorder %s88, %s91
      %p97 = scmp.eq.s32.totalorder %s28, 0
      %p98 = por %p96, %p97
      %p99 = scmp.ne.s32.totalorder %s88, %s91
      %p100 = scmp.eq.s32.totalorder %s33, 3
      %p101 = por %p99, %p100
      %p102 = scmp.ne.s32.totalorder %s91, %s92
      %p103 = scmp.eq.s32.totalorder %s33, 0
      %p104 = por %p102, %p103
      %p105 = scmp.ne.s32.totalorder %s91, %s92
      %p106 = scmp.eq.s32.totalorder %s34, 3
      %p107 = por %p105, %p106
      %p109 = scmp.ne.s32.totalorder %s92, %s108
      %p110 = scmp.eq.s32.totalorder %s34, 0
      %p111 = por %p109, %p110
      %s112 = sadd.s32 %s36, 1
      %s113 = smul.u32 %s112, 8
      %p114 = scmp.lt.s32.totalorder %s113, 15
      %s115 = scalar_select %p114, %s113, 15
      %s116 = sadd.s32 %s43, 1
      %s117 = smul.u32 %s116, 8
      %p118 = scmp.lt.s32.totalorder %s117, 15
      %s119 = scalar_select %p118, %s117, 15
      %s120 = ssub.s32 %s35, %s47
      %s121 = ssub.s32 %s115, %s119
      %s122 = sor.u32 %s120, %s121
      %p123 = scmp.eq.s32.totalorder %s122, 0
      %s125 = sadd.s32 %s124, 1
      %s126 = scalar_select %p123, %s124, %s125
      %p129 = pneg %p123
      %p130 = scmp.eq.s32.totalorder %s28, 3
      %p131 = por %p129, %p130
      %p132 = scmp.ne.s32.totalorder %s124, %s127
      %p133 = scmp.eq.s32.totalorder %s28, 0
      %p134 = por %p132, %p133
      %p135 = scmp.ne.s32.totalorder %s124, %s127
      %p136 = scmp.eq.s32.totalorder %s33, 3
      %p137 = por %p135, %p136
      %p138 = scmp.ne.s32.totalorder %s127, %s128
      %p139 = scmp.eq.s32.totalorder %s33, 0
      %p140 = por %p138, %p139
      %p141 = scmp.ne.s32.totalorder %s127, %s128
      %p142 = scmp.eq.s32.totalorder %s34, 3
      %p143 = por %p141, %p142
      %p145 = scmp.ne.s32.totalorder %s128, %s144
      %p146 = scmp.eq.s32.totalorder %s34, 0
      %p147 = por %p145, %p146
      %s149 = sadd.s32 %s148, 1
      %p152 = scmp.eq.s32.totalorder %s28, 3
      %p153 = scmp.ne.s32.totalorder %s148, %s150
      %p154 = scmp.eq.s32.totalorder %s28, 0
      %p155 = por %p153, %p154
      %p156 = scmp.ne.s32.totalorder %s148, %s150
      %p157 = scmp.eq.s32.totalorder %s33, 3
      %p158 = por %p156, %p157
      %p159 = scmp.ne.s32.totalorder %s150, %s151
      %p160 = scmp.eq.s32.totalorder %s33, 0
      %p161 = por %p159, %p160
      %p162 = scmp.ne.s32.totalorder %s150, %s151
      %p163 = scmp.eq.s32.totalorder %s34, 3
      %p164 = por %p162, %p163
      %p166 = scmp.ne.s32.totalorder %s151, %s165
      %p167 = scmp.eq.s32.totalorder %s34, 0
      %p168 = por %p166, %p167
      %s170 = sadd.s32 %s169, 1
      %p173 = scmp.eq.s32.totalorder %s28, 3
      %p174 = scmp.ne.s32.totalorder %s169, %s171
      %p175 = scmp.eq.s32.totalorder %s28, 0
      %p176 = por %p174, %p175
      %p177 = scmp.ne.s32.totalorder %s169, %s171
      %p178 = scmp.eq.s32.totalorder %s33, 3
      %p179 = por %p177, %p178
      %p180 = scmp.ne.s32.totalorder %s171, %s172
      %p181 = scmp.eq.s32.totalorder %s33, 0
      %p182 = por %p180, %p181
      %p183 = scmp.ne.s32.totalorder %s171, %s172
      %p184 = scmp.eq.s32.totalorder %s34, 3
      %p185 = por %p183, %p184
      %p187 = scmp.ne.s32.totalorder %s172, %s186
      %p188 = scmp.eq.s32.totalorder %s34, 0
      %p189 = por %p187, %p188
      %s191 = sadd.s32 %s190, 1
      %p194 = scmp.eq.s32.totalorder %s28, 3
      %p195 = scmp.ne.s32.totalorder %s190, %s192
      %p196 = scmp.eq.s32.totalorder %s28, 0
      %p197 = por %p195, %p196
      %p198 = scmp.ne.s32.totalorder %s190, %s192
      %p199 = scmp.eq.s32.totalorder %s33, 3
      %p200 = por %p198, %p199
      %p201 = scmp.ne.s32.totalorder %s192, %s193
      %p202 = scmp.eq.s32.totalorder %s33, 0
      %p203 = por %p201, %p202
      %p204 = scmp.ne.s32.totalorder %s192, %s193
      %p205 = scmp.eq.s32.totalorder %s34, 3
      %p206 = por %p204, %p205
      %p208 = scmp.ne.s32.totalorder %s193, %s207
      %p209 = scmp.eq.s32.totalorder %s34, 0
      %p210 = por %p208, %p209
      %s211 = ssub.s32 %s35, %s47
      %s212 = ssub.s32 %s36, %s43
      %s213 = sor.u32 %s211, %s212
      %p214 = scmp.eq.s32.totalorder %s213, 0
      %s216 = sadd.s32 %s215, 1
      %s217 = scalar_select %p214, %s215, %s216
      %p220 = pneg %p214
      %p221 = scmp.eq.s32.totalorder %s28, 3
      %p222 = por %p220, %p221
      %p223 = scmp.ne.s32.totalorder %s215, %s218
      %p224 = scmp.eq.s32.totalorder %s28, 0
      %p225 = por %p223, %p224
      %p226 = scmp.ne.s32.totalorder %s215, %s218
      %p227 = scmp.eq.s32.totalorder %s33, 3
      %p228 = por %p226, %p227
      %p229 = scmp.ne.s32.totalorder %s218, %s219
      %p230 = scmp.eq.s32.totalorder %s33, 0
      %p231 = por %p229, %p230
      %p232 = scmp.ne.s32.totalorder %s218, %s219
      %p233 = scmp.eq.s32.totalorder %s34, 3
      %p234 = por %p232, %p233
      %p236 = scmp.ne.s32.totalorder %s219, %s235
      %p237 = scmp.eq.s32.totalorder %s34, 0
      %p238 = por %p236, %p237
      %s239 = ssub.s32 %s35, %s47
      %s240 = ssub.s32 %s36, %s43
      %s241 = sor.u32 %s239, %s240
      %p242 = scmp.eq.s32.totalorder %s241, 0
      %s244 = sadd.s32 %s243, 1
      %s245 = scalar_select %p242, %s243, %s244
      %p248 = pneg %p242
      %p249 = scmp.eq.s32.totalorder %s28, 3
      %p250 = por %p248, %p249
      %p251 = scmp.ne.s32.totalorder %s243, %s246
      %p252 = scmp.eq.s32.totalorder %s28, 0
      %p253 = por %p251, %p252
      %p254 = scmp.ne.s32.totalorder %s243, %s246
      %p255 = scmp.eq.s32.totalorder %s33, 3
      %p256 = por %p254, %p255
      %p257 = scmp.ne.s32.totalorder %s246, %s247
      %p258 = scmp.eq.s32.totalorder %s33, 0
      %p259 = por %p257, %p258
      %p260 = scmp.ne.s32.totalorder %s246, %s247
      %p261 = scmp.eq.s32.totalorder %s34, 3
      %p262 = por %p260, %p261
      %p264 = scmp.ne.s32.totalorder %s247, %s263
      %p265 = scmp.eq.s32.totalorder %s34, 0
      %p266 = por %p264, %p265
      %s267 = ssub.s32 %s35, %s47
      %s268 = ssub.s32 %s36, %s43
      %s269 = sor.u32 %s267, %s268
      %p270 = scmp.eq.s32.totalorder %s269, 0
      %s272 = sadd.s32 %s271, 1
      %s273 = scalar_select %p270, %s271, %s272
      %p276 = pneg %p270
      %p277 = scmp.eq.s32.totalorder %s28, 3
      %p278 = por %p276, %p277
      %p279 = scmp.ne.s32.totalorder %s271, %s274
      %p280 = scmp.eq.s32.totalorder %s28, 0
      %p281 = por %p279, %p280
      %p282 = scmp.ne.s32.totalorder %s271, %s274
      %p283 = scmp.eq.s32.totalorder %s33, 3
      %p284 = por %p282, %p283
      %p285 = scmp.ne.s32.totalorder %s274, %s275
      %p286 = scmp.eq.s32.totalorder %s33, 0
      %p287 = por %p285, %p286
      %p288 = scmp.ne.s32.totalorder %s274, %s275
      %p289 = scmp.eq.s32.totalorder %s34, 3
      %p290 = por %p288, %p289
      %p292 = scmp.ne.s32.totalorder %s275, %s291
      %p293 = scmp.eq.s32.totalorder %s34, 0
      %p294 = por %p292, %p293
      %p295 = scmp.le.s32.totalorder 1, %s28
      %p296 = scmp.lt.s32.totalorder %s28, 5
      %p297 = pnand %p295, %p296
      %p298 = pneg %p297
      // Predicated region
      $region9: #{tpu_custom_call.1} parent=5 // pred_check
        _
      $region10: #{tpu_custom_call.1} parent=5 // pred_check_branch
        %300 = sbr.rel (%p297) target = $region12
      $region11: #{tpu_custom_call.1} parent=5 // pred_region
        %s301 = ssub.s32 %s28, 1
        // Predicated region
        $region13: #{tpu_custom_call.1} parent=11 // pred_check
          %p302 = pneg %p161
        $region14: #{tpu_custom_call.1} parent=11 // pred_check_branch
          %304 = sbr.rel (%p302) target = $region16
        $region15: #{tpu_custom_call.1} parent=11 // pred_region
          %s306 = ssub.s32 9216, 9216
          %307 = vsyncadd [#allocation11], %s306
          %s308 = sshll.u32 [#allocation10], 4
          %s309 = int_to_ptr.vmem [resolvable:$true] %s308
          %314 = dma.hbm_to_vmem [thread:$0]  %s3, 9216, %s309, [#allocation11], 64, 64, 4
        $region16: #{tpu_custom_call.1} parent=11 // pred_fallthru
          _
        // Predicated region
        $region17: #{tpu_custom_call.1} parent=11 // pred_check
          %p315 = pneg %p182
        $region18: #{tpu_custom_call.1} parent=11 // pred_check_branch
          %317 = sbr.rel (%p315) target = $region20
        $region19: #{tpu_custom_call.1} parent=11 // pred_region
          _
        $region20: #{tpu_custom_call.1} parent=11 // pred_fallthru
          _
        // Predicated region
        $region21: #{tpu_custom_call.1} parent=11 // pred_check
          %p318 = pneg %p203
        $region22: #{tpu_custom_call.1} parent=11 // pred_check_branch
          %320 = sbr.rel (%p318) target = $region24
        $region23: #{tpu_custom_call.1} parent=11 // pred_region
          _
        $region24: #{tpu_custom_call.1} parent=11 // pred_fallthru
          _
      $region12: #{tpu_custom_call.1} parent=5 // pred_fallthru
        _
      %p321 = scmp.lt.s32.totalorder %s28, 4
      // Predicated region
      $region25: #{tpu_custom_call.1} parent=5 // pred_check
        %p322 = pneg %p321
      $region26: #{tpu_custom_call.1} parent=5 // pred_check_branch
        %324 = sbr.rel (%p322) target = $region28
      $region27: #{tpu_custom_call.1} parent=5 // pred_region
        // Predicated region
        $region29: #{tpu_custom_call.1} parent=27 // pred_check
          %p325 = pneg %p62
        $region30: #{tpu_custom_call.1} parent=27 // pred_check_branch
          %327 = sbr.rel (%p325) target = $region32
        $region31: #{tpu_custom_call.1} parent=27 // pred_region
          %s328 = sand.u32 %s52, 1
          %s329 = scalar_lea.sflag [#allocation5], %s328
          %s330 = sand.u32 %s52, 1
          %s331 = smul.addr %s330, 64
          %s332 = scalar_lea.vmem [#allocation4], %s331
          %s333 = smul.u32 8, %s36
          %s335 = ssub.s32 1024, 1024
          %336 = vsyncadd %s329, %s335
          %s337 = smul.addr %s333, 2
          %s338 = smul.addr %s35, 32
          %s339 = sadd.s32 %s337, %s338
          %s340 = smul.addr %s339, 64
          %s341 = scalar_lea.hbm %s0, %s340
          %s342 = sshll.u32 %s332, 4
          %s343 = int_to_ptr.vmem [resolvable:$true] %s342
          %348 = dma.hbm_to_vmem [thread:$0]  %s341, 1024, %s343, %s329, 64, 64, 4
        $region32: #{tpu_custom_call.1} parent=27 // pred_fallthru
          _
        // Predicated region
        $region33: #{tpu_custom_call.1} parent=27 // pred_check
          %p349 = pneg %p98
        $region34: #{tpu_custom_call.1} parent=27 // pred_check_branch
          %351 = sbr.rel (%p349) target = $region36
        $region35: #{tpu_custom_call.1} parent=27 // pred_region
          %s352 = sand.u32 %s28, 1
          %s353 = scalar_lea.sflag [#allocation8], %s352
          %s354 = sand.u32 %s88, 1
          %s355 = smul.addr %s354, 8
          %s356 = scalar_lea.vmem [#allocation7], %s355
          %s357 = smul.u32 %s36, 8
          %s358 = ssub.s32 %s357, 1
          %p359 = scmp.gt.s32.totalorder %s358, 0
          %s360 = scalar_select %p359, %s358, 0
          %s362 = ssub.s32 128, 128
          %363 = vsyncadd %s353, %s362
          %s364 = smul.addr %s360, 2
          %s365 = smul.addr %s35, 32
          %s366 = sadd.s32 %s364, %s365
          %s367 = smul.addr %s366, 64
          %s368 = scalar_lea.hbm %s1, %s367
          %s369 = sshll.u32 %s356, 4
          %s370 = int_to_ptr.vmem [resolvable:$true] %s369
          %375 = dma.hbm_to_vmem [thread:$0]  %s368, 128, %s370, %s353, 64, 64, 4
        $region36: #{tpu_custom_call.1} parent=27 // pred_fallthru
          _
        // Predicated region
        $region37: #{tpu_custom_call.1} parent=27 // pred_check
          %p376 = pneg %p134
        $region38: #{tpu_custom_call.1} parent=27 // pred_check_branch
          %378 = sbr.rel (%p376) target = $region40
        $region39: #{tpu_custom_call.1} parent=27 // pred_region
          %s379 = sand.u32 %s28, 1
          %s380 = scalar_lea.sflag [#allocation8], %s379
          %s381 = sand.u32 %s124, 1
          %s382 = smul.addr %s381, 8
          %s383 = scalar_lea.vmem [#allocation9], %s382
          %s384 = sadd.s32 %s36, 1
          %s385 = smul.u32 %s384, 8
          %p386 = scmp.lt.s32.totalorder %s385, 15
          %s387 = scalar_select %p386, %s385, 15
          %s389 = ssub.s32 128, 128
          %390 = vsyncadd %s380, %s389
          %s391 = smul.addr %s387, 2
          %s392 = smul.addr %s35, 32
          %s393 = sadd.s32 %s391, %s392
          %s394 = smul.addr %s393, 64
          %s395 = scalar_lea.hbm %s2, %s394
          %s396 = sshll.u32 %s383, 4
          %s397 = int_to_ptr.vmem [resolvable:$true] %s396
          %402 = dma.hbm_to_vmem [thread:$0]  %s395, 128, %s397, %s380, 64, 64, 4
        $region40: #{tpu_custom_call.1} parent=27 // pred_fallthru
          _
      $region28: #{tpu_custom_call.1} parent=5 // pred_fallthru
        _
      %p403 = scmp.le.s32.totalorder 1, %s28
      %p404 = scmp.lt.s32.totalorder %s28, 5
      %p405 = pnand %p403, %p404
      %p406 = pneg %p405
      // Predicated region
      $region41: #{tpu_custom_call.1} parent=5 // pred_check
        _
      $region42: #{tpu_custom_call.1} parent=5 // pred_check_branch
        %408 = sbr.rel (%p405) target = $region44
      $region43: #{tpu_custom_call.1} parent=5 // pred_region
        %s409 = ssub.s32 %s28, 1
        %s410 = sand.u32 %s55, 1
        %s411 = scalar_lea.sflag [#allocation5], %s410
        %s412 = sand.u32 %s55, 1
        %s413 = smul.addr %s412, 64
        %s414 = scalar_lea.vmem [#allocation4], %s413
        // Predicated region
        $region45: #{tpu_custom_call.1} parent=43 // pred_check
          %p415 = pneg %p68
        $region46: #{tpu_custom_call.1} parent=43 // pred_check_branch
          %417 = sbr.rel (%p415) target = $region48
        $region47: #{tpu_custom_call.1} parent=43 // pred_region
          %418 = dma.done %s411, 1024
        $region48: #{tpu_custom_call.1} parent=43 // pred_fallthru
          _
        %s419 = sand.u32 %s33, 1
        %s420 = scalar_lea.sflag [#allocation8], %s419
        %s421 = sand.u32 %s91, 1
        %s422 = smul.addr %s421, 8
        %s423 = scalar_lea.vmem [#allocation7], %s422
        // Predicated region
        $region49: #{tpu_custom_call.1} parent=43 // pred_check
          %p424 = pneg %p104
        $region50: #{tpu_custom_call.1} parent=43 // pred_check_branch
          %426 = sbr.rel (%p424) target = $region52
        $region51: #{tpu_custom_call.1} parent=43 // pred_region
          %427 = dma.done %s420, 128
        $region52: #{tpu_custom_call.1} parent=43 // pred_fallthru
          _
        %s428 = sand.u32 %s33, 1
        %s429 = scalar_lea.sflag [#allocation8], %s428
        %s430 = sand.u32 %s127, 1
        %s431 = smul.addr %s430, 8
        %s432 = scalar_lea.vmem [#allocation9], %s431
        // Predicated region
        $region53: #{tpu_custom_call.1} parent=43 // pred_check
          %p433 = pneg %p140
        $region54: #{tpu_custom_call.1} parent=43 // pred_check_branch
          %435 = sbr.rel (%p433) target = $region56
        $region55: #{tpu_custom_call.1} parent=43 // pred_region
          %436 = dma.done %s429, 128
        $region56: #{tpu_custom_call.1} parent=43 // pred_fallthru
          _
        // Predicated region
        $region57: #{tpu_custom_call.1} parent=43 // pred_check
          %p437 = pneg %p161
        $region58: #{tpu_custom_call.1} parent=43 // pred_check_branch
          %439 = sbr.rel (%p437) target = $region60
        $region59: #{tpu_custom_call.1} parent=43 // pred_region
          %440 = dma.done [#allocation11], 9216
        $region60: #{tpu_custom_call.1} parent=43 // pred_fallthru
          _
        %s441 = sand.u32 %s55, 1
        %s442 = scalar_lea.sflag [#allocation5], %s441
        %s443 = sand.u32 %s55, 1
        %s444 = smul.addr %s443, 64
        %s445 = scalar_lea.vmem [#allocation4], %s444
        %p446 = pneg %p68
        %p447 = pneg %p65
        %s448 = sand.u32 %s33, 1
        %s449 = scalar_lea.sflag [#allocation8], %s448
        %s450 = sand.u32 %s91, 1
        %s451 = smul.addr %s450, 8
        %s452 = scalar_lea.vmem [#allocation7], %s451
        %p453 = pneg %p104
        %p454 = pneg %p101
        %s455 = sand.u32 %s33, 1
        %s456 = scalar_lea.sflag [#allocation8], %s455
        %s457 = sand.u32 %s127, 1
        %s458 = smul.addr %s457, 8
        %s459 = scalar_lea.vmem [#allocation9], %s458
        %p460 = pneg %p140
        %p461 = pneg %p137
        %p462 = pneg %p161
        %p463 = pneg %p158
        %p464 = pneg %p182
        %p465 = pneg %p179
        %p466 = pneg %p203
        %p467 = pneg %p200
        %p468 = pneg %p231
        %p469 = pneg %p228
        %s470 = sand.u32 %s218, 1
        %s471 = scalar_lea.sflag [#allocation6], %s470
        %s472 = sand.u32 %s218, 1
        %s473 = smul.addr %s472, 64
        %s474 = scalar_lea.vmem [#allocation12], %s473
        %p475 = pneg %p259
        %p476 = pneg %p256
        %s477 = sand.u32 %s33, 1
        %s478 = scalar_lea.sflag [#allocation14], %s477
        %s479 = sand.u32 %s246, 1
        %s480 = scalar_lea.vmem [#allocation13], %s479
        %p481 = pneg %p287
        %p482 = pneg %p284
        %s483 = sand.u32 %s33, 1
        %s484 = scalar_lea.sflag [#allocation14], %s483
        %s485 = sand.u32 %s274, 1
        %s486 = scalar_lea.vmem [#allocation15], %s485
        %s487 = smul.u32 8, %s38
        %s488 = smul.u32 %s38, 8
        %s489 = ssub.s32 %s488, 1
        %p490 = scmp.gt.s32.totalorder %s489, 0
        %s491 = scalar_select %p490, %s489, 0
        %s492 = sadd.s32 %s38, 1
        %s493 = smul.u32 %s492, 8
        %p494 = scmp.lt.s32.totalorder %s493, 15
        %s495 = scalar_select %p494, %s493, 15
        %s496 = smul.u32 8, %s38
        %498 = vst [vmem:[#allocation2] sm:$0xf] 0
        %499 = vst [vmem:[#allocation2 + $0x4] sm:$0xf] 0
        %500 = vst [vmem:[#allocation2 + $0x8] sm:$0x1] 0
        %501 = vst [vmem:[#allocation2 + $0xc] sm:$0xf] 0
        %502 = vst [vmem:[#allocation2 + $0x10] sm:$0xf] 0
        %503 = vst [vmem:[#allocation2 + $0x14] sm:$0x1] 0
        %504 = vst [vmem:[#allocation2 + $0x18] sm:$0xf] 0
        %505 = vst [vmem:[#allocation2 + $0x1c] sm:$0xf] 0
        %506 = vst [vmem:[#allocation2 + $0x20] sm:$0x1] 0
        %507 = vst [vmem:[#allocation2 + $0x24] sm:$0xf] 0
        %508 = vst [vmem:[#allocation2 + $0x28] sm:$0xf] 0
        %509 = vst [vmem:[#allocation2 + $0x2c] sm:$0x1] 0
        %510 = vst [vmem:[#allocation2 + $0x30] sm:$0xf] 0
        %511 = vst [vmem:[#allocation2 + $0x34] sm:$0xf] 0
        %512 = vst [vmem:[#allocation2 + $0x38] sm:$0x1] 0
        %513 = vst [vmem:[#allocation2 + $0x3c] sm:$0xf] 0
        %514 = vst [vmem:[#allocation2 + $0x40] sm:$0xf] 0
        %515 = vst [vmem:[#allocation2 + $0x44] sm:$0x1] 0
        %516 = vst [vmem:[#allocation2 + $0x48] sm:$0xf] 0
        %517 = vst [vmem:[#allocation2 + $0x4c] sm:$0xf] 0
        %518 = vst [vmem:[#allocation2 + $0x50] sm:$0x1] 0
        %519 = vst [vmem:[#allocation2 + $0x54] sm:$0xf] 0
        %520 = vst [vmem:[#allocation2 + $0x58] sm:$0xf] 0
        %521 = vst [vmem:[#allocation2 + $0x5c] sm:$0x1] 0
        %522 = vst [vmem:[#allocation2 + $0x60] sm:$0xf] 0
        %523 = vst [vmem:[#allocation2 + $0x64] sm:$0xf] 0
        %524 = vst [vmem:[#allocation2 + $0x68] sm:$0x1] 0
        %525 = vst [vmem:[#allocation2 + $0x6c] sm:$0xf] 0
        %526 = vst [vmem:[#allocation2 + $0x70] sm:$0xf] 0
        %527 = vst [vmem:[#allocation2 + $0x74] sm:$0x1] 0
        %v528 = vld [vmem:[%s414] sm:$0xf]
        %v529 = vld [vmem:[%s414 + $0x4] sm:$0xf]
        %v530 = vld [vmem:[%s414 + $0x8] sm:$0xf]
        %v531 = vld [vmem:[%s414 + $0xc] sm:$0xf]
        %v532 = vld [vmem:[%s414 + $0x10] sm:$0xf]
        %v533 = vld [vmem:[%s414 + $0x14] sm:$0xf]
        %v534 = vld [vmem:[%s414 + $0x18] sm:$0xf]
        %v535 = vld [vmem:[%s414 + $0x1c] sm:$0xf]
        %v536 = vld [vmem:[%s414 + $0x20] sm:$0xf]
        %v537 = vld [vmem:[%s414 + $0x24] sm:$0xf]
        %v538 = vld [vmem:[%s414 + $0x28] sm:$0xf]
        %v539 = vld [vmem:[%s414 + $0x2c] sm:$0xf]
        %v540 = vld [vmem:[%s414 + $0x30] sm:$0xf]
        %v541 = vld [vmem:[%s414 + $0x34] sm:$0xf]
        %v542 = vld [vmem:[%s414 + $0x38] sm:$0xf]
        %v543 = vld [vmem:[%s414 + $0x3c] sm:$0xf]
        %vm544 = vsmask.f32 256
        %vm545 = vsmask.f32 4368
        %vm546 = vmor %vm544, %vm545
        %v548 = vshrl.u32 %v528, 16
        %v550 = vrot.slane %v548, 7
        %v551 = vshll.u32 %v528, 16
        %v553 = vor.u32 %v550, %v551
        %v554 = vrot.slane %v550, 4
        %v556 = vshrl.u32 %v529, 16
        %v558 = vrot.slane %v556, 7
        %v559 = vshll.u32 %v529, 16
        %v561 = vor.u32 %v558, %v559
        %v562 = vsel %vm546, %v554, %v561
        %v563 = vrot.slane %v558, 4
        %v565 = vshrl.u32 %v530, 16
        %v567 = vrot.slane %v565, 7
        %v568 = vshll.u32 %v530, 16
        %v570 = vor.u32 %v567, %v568
        %v571 = vrot.slane %v567, 4
        %v573 = vshrl.u32 %v531, 16
        %v575 = vrot.slane %v573, 7
        %v576 = vshll.u32 %v531, 16
        %v578 = vor.u32 %v575, %v576
        %v579 = vsel %vm546, %v571, %v578
        %v580 = vrot.slane %v575, 4
        %v582 = vshrl.u32 %v532, 16
        %v584 = vrot.slane %v582, 7
        %v585 = vshll.u32 %v532, 16
        %v587 = vor.u32 %v584, %v585
        %v588 = vrot.slane %v584, 4
        %v590 = vshrl.u32 %v533, 16
        %v592 = vrot.slane %v590, 7
        %v593 = vshll.u32 %v533, 16
        %v595 = vor.u32 %v592, %v593
        %v596 = vsel %vm546, %v588, %v595
        %v597 = vrot.slane %v592, 4
        %v599 = vshrl.u32 %v534, 16
        %v601 = vrot.slane %v599, 7
        %v602 = vshll.u32 %v534, 16
        %v604 = vor.u32 %v601, %v602
        %v605 = vrot.slane %v601, 4
        %v607 = vshrl.u32 %v535, 16
        %v609 = vrot.slane %v607, 7
        %v610 = vshll.u32 %v535, 16
        %v612 = vor.u32 %v609, %v610
        %v613 = vsel %vm546, %v605, %v612
        %v614 = vrot.slane %v609, 4
        %v616 = vshrl.u32 %v536, 16
        %v618 = vrot.slane %v616, 7
        %v619 = vshll.u32 %v536, 16
        %v621 = vor.u32 %v618, %v619
        %v622 = vrot.slane %v618, 4
        %v624 = vshrl.u32 %v537, 16
        %v626 = vrot.slane %v624, 7
        %v627 = vshll.u32 %v537, 16
        %v629 = vor.u32 %v626, %v627
        %v630 = vsel %vm546, %v622, %v629
        %v631 = vrot.slane %v626, 4
        %v633 = vshrl.u32 %v538, 16
        %v635 = vrot.slane %v633, 7
        %v636 = vshll.u32 %v538, 16
        %v638 = vor.u32 %v635, %v636
        %v639 = vrot.slane %v635, 4
        %v641 = vshrl.u32 %v539, 16
        %v643 = vrot.slane %v641, 7
        %v644 = vshll.u32 %v539, 16
        %v646 = vor.u32 %v643, %v644
        %v647 = vsel %vm546, %v639, %v646
        %v648 = vrot.slane %v643, 4
        %v650 = vshrl.u32 %v540, 16
        %v652 = vrot.slane %v650, 7
        %v653 = vshll.u32 %v540, 16
        %v655 = vor.u32 %v652, %v653
        %v656 = vrot.slane %v652, 4
        %v658 = vshrl.u32 %v541, 16
        %v660 = vrot.slane %v658, 7
        %v661 = vshll.u32 %v541, 16
        %v663 = vor.u32 %v660, %v661
        %v664 = vsel %vm546, %v656, %v663
        %v665 = vrot.slane %v660, 4
        %v667 = vshrl.u32 %v542, 16
        %v669 = vrot.slane %v667, 7
        %v670 = vshll.u32 %v542, 16
        %v672 = vor.u32 %v669, %v670
        %v673 = vrot.slane %v669, 4
        %v675 = vshrl.u32 %v543, 16
        %v677 = vrot.slane %v675, 7
        %v678 = vshll.u32 %v543, 16
        %v680 = vor.u32 %v677, %v678
        %v681 = vsel %vm546, %v673, %v680
        %v682 = vrot.slane %v677, 4
        %s707 = scalar_lea.vmem [#allocation2], 12
        %vm708 = vcmask 1043456
        %vm709 = vsmask.f32 7938
        %vm710 = vmand %vm708, %vm709
        %v711 = vld [vmem:[%s707] sm:$0xf]
        %v712 = vsel %vm710, %v553, %v711
        %713 = vst [vmem:[%s707] sm:$0xf] %v712
        %714 = vst [vmem:[%s707 + $0x4] sm:$0xf] %v562
        %vm715 = vcmask 1040384
        %vm716 = vmand %vm715, %vm544
        %v717 = vld [vmem:[%s707 + $0x8] sm:$0x1]
        %v718 = vsel %vm716, %v563, %v717
        %719 = vst [vmem:[%s707 + $0x8] sm:$0x1] %v718
        %v720 = vld [vmem:[%s707 + $0xc] sm:$0xf]
        %v721 = vsel %vm710, %v570, %v720
        %722 = vst [vmem:[%s707 + $0xc] sm:$0xf] %v721
        %723 = vst [vmem:[%s707 + $0x10] sm:$0xf] %v579
        %v724 = vld [vmem:[%s707 + $0x14] sm:$0x1]
        %v725 = vsel %vm716, %v580, %v724
        %726 = vst [vmem:[%s707 + $0x14] sm:$0x1] %v725
        %v727 = vld [vmem:[%s707 + $0x18] sm:$0xf]
        %v728 = vsel %vm710, %v587, %v727
        %729 = vst [vmem:[%s707 + $0x18] sm:$0xf] %v728
        %730 = vst [vmem:[%s707 + $0x1c] sm:$0xf] %v596
        %v731 = vld [vmem:[%s707 + $0x20] sm:$0x1]
        %v732 = vsel %vm716, %v597, %v731
        %733 = vst [vmem:[%s707 + $0x20] sm:$0x1] %v732
        %v734 = vld [vmem:[%s707 + $0x24] sm:$0xf]
        %v735 = vsel %vm710, %v604, %v734
        %736 = vst [vmem:[%s707 + $0x24] sm:$0xf] %v735
        %737 = vst [vmem:[%s707 + $0x28] sm:$0xf] %v613
        %v738 = vld [vmem:[%s707 + $0x2c] sm:$0x1]
        %v739 = vsel %vm716, %v614, %v738
        %740 = vst [vmem:[%s707 + $0x2c] sm:$0x1] %v739
        %v741 = vld [vmem:[%s707 + $0x30] sm:$0xf]
        %v742 = vsel %vm710, %v621, %v741
        %743 = vst [vmem:[%s707 + $0x30] sm:$0xf] %v742
        %744 = vst [vmem:[%s707 + $0x34] sm:$0xf] %v630
        %v745 = vld [vmem:[%s707 + $0x38] sm:$0x1]
        %v746 = vsel %vm716, %v631, %v745
        %747 = vst [vmem:[%s707 + $0x38] sm:$0x1] %v746
        %v748 = vld [vmem:[%s707 + $0x3c] sm:$0xf]
        %v749 = vsel %vm710, %v638, %v748
        %750 = vst [vmem:[%s707 + $0x3c] sm:$0xf] %v749
        %751 = vst [vmem:[%s707 + $0x40] sm:$0xf] %v647
        %v752 = vld [vmem:[%s707 + $0x44] sm:$0x1]
        %v753 = vsel %vm716, %v648, %v752
        %754 = vst [vmem:[%s707 + $0x44] sm:$0x1] %v753
        %v755 = vld [vmem:[%s707 + $0x48] sm:$0xf]
        %v756 = vsel %vm710, %v655, %v755
        %757 = vst [vmem:[%s707 + $0x48] sm:$0xf] %v756
        %758 = vst [vmem:[%s707 + $0x4c] sm:$0xf] %v664
        %v759 = vld [vmem:[%s707 + $0x50] sm:$0x1]
        %v760 = vsel %vm716, %v665, %v759
        %761 = vst [vmem:[%s707 + $0x50] sm:$0x1] %v760
        %v762 = vld [vmem:[%s707 + $0x54] sm:$0xf]
        %v763 = vsel %vm710, %v672, %v762
        %764 = vst [vmem:[%s707 + $0x54] sm:$0xf] %v763
        %765 = vst [vmem:[%s707 + $0x58] sm:$0xf] %v681
        %v766 = vld [vmem:[%s707 + $0x5c] sm:$0x1]
        %v767 = vsel %vm716, %v682, %v766
        %768 = vst [vmem:[%s707 + $0x5c] sm:$0x1] %v767
        %p769 = scmp.gt.s32.totalorder %s38, 0
        // Predicated region
        $region61: #{tpu_custom_call.1} parent=43 // pred_check
          %p770 = pneg %p769
        $region62: #{tpu_custom_call.1} parent=43 // pred_check_branch
          %772 = sbr.rel (%p770) target = $region64
        $region63: #{tpu_custom_call.1} parent=43 // pred_region
          %v773 = vld [vmem:[%s423] sm:$0xf]
          %v774 = vld [vmem:[%s423 + $0x4] sm:$0xf]
          %v776 = vshrl.u32 %v773, 16
          %v778 = vrot.slane %v776, 7
          %v779 = vshll.u32 %v773, 16
          %v781 = vor.u32 %v778, %v779
          %v782 = vrot.slane %v778, 4
          %v784 = vshrl.u32 %v774, 16
          %v786 = vrot.slane %v784, 7
          %v787 = vshll.u32 %v774, 16
          %v789 = vor.u32 %v786, %v787
          %v790 = vsel %vm546, %v782, %v789
          %v791 = vrot.slane %v786, 4
          %v795 = vld [vmem:[#allocation2] sm:$0xf]
          %v796 = vsel %vm710, %v781, %v795
          %797 = vst [vmem:[#allocation2] sm:$0xf] %v796
          %798 = vst [vmem:[#allocation2 + $0x4] sm:$0xf] %v790
          %v799 = vld [vmem:[#allocation2 + $0x8] sm:$0x1]
          %v800 = vsel %vm716, %v791, %v799
          %801 = vst [vmem:[#allocation2 + $0x8] sm:$0x1] %v800
        $region64: #{tpu_custom_call.1} parent=43 // pred_fallthru
          _
        %p802 = scmp.lt.s32.totalorder %s38, 1
        // Predicated region
        $region65: #{tpu_custom_call.1} parent=43 // pred_check
          %p803 = pneg %p802
        $region66: #{tpu_custom_call.1} parent=43 // pred_check_branch
          %805 = sbr.rel (%p803) target = $region68
        $region67: #{tpu_custom_call.1} parent=43 // pred_region
          %v806 = vld [vmem:[%s432] sm:$0xf]
          %v807 = vld [vmem:[%s432 + $0x4] sm:$0xf]
          %v809 = vshrl.u32 %v806, 16
          %v811 = vrot.slane %v809, 7
          %v812 = vshll.u32 %v806, 16
          %v814 = vor.u32 %v811, %v812
          %v815 = vrot.slane %v811, 4
          %v817 = vshrl.u32 %v807, 16
          %v819 = vrot.slane %v817, 7
          %v820 = vshll.u32 %v807, 16
          %v822 = vor.u32 %v819, %v820
          %v823 = vsel %vm546, %v815, %v822
          %v824 = vrot.slane %v819, 4
          %s828 = scalar_lea.vmem [#allocation2], 108
          %v829 = vld [vmem:[%s828] sm:$0xf]
          %v830 = vsel %vm710, %v814, %v829
          %831 = vst [vmem:[%s828] sm:$0xf] %v830
          %832 = vst [vmem:[%s828 + $0x4] sm:$0xf] %v823
          %v833 = vld [vmem:[%s828 + $0x8] sm:$0x1]
          %v834 = vsel %vm716, %v824, %v833
          %835 = vst [vmem:[%s828 + $0x8] sm:$0x1] %v834
        $region68: #{tpu_custom_call.1} parent=43 // pred_fallthru
          _
        %v836 = vld [vmem:[#allocation2] sm:$0xf]
        %v837 = vld [vmem:[#allocation2 + $0x4] sm:$0xf]
        %v838 = vld [vmem:[#allocation2 + $0xc] sm:$0xf]
        %v839 = vld [vmem:[#allocation2 + $0x10] sm:$0xf]
        %v840 = vld [vmem:[#allocation2 + $0x18] sm:$0xf]
        %v841 = vld [vmem:[#allocation2 + $0x1c] sm:$0xf]
        %v842 = vld [vmem:[#allocation2 + $0x24] sm:$0xf]
        %v843 = vld [vmem:[#allocation2 + $0x28] sm:$0xf]
        %v844 = vld [vmem:[#allocation2 + $0x30] sm:$0xf]
        %v845 = vld [vmem:[#allocation2 + $0x34] sm:$0xf]
        %v846 = vld [vmem:[#allocation2 + $0x3c] sm:$0xf]
        %v847 = vld [vmem:[#allocation2 + $0x40] sm:$0xf]
        %v848 = vld [vmem:[#allocation2 + $0x48] sm:$0xf]
        %v849 = vld [vmem:[#allocation2 + $0x4c] sm:$0xf]
        %v850 = vld [vmem:[#allocation2 + $0x54] sm:$0xf]
        %v851 = vld [vmem:[#allocation2 + $0x58] sm:$0xf]
        %v852 = vld [vmem:[#allocation2 + $0x60] sm:$0xf]
        %v853 = vld [vmem:[#allocation2 + $0x64] sm:$0xf]
        %v854 = vld [vmem:[#allocation2 + $0x6c] sm:$0xf]
        %v855 = vld [vmem:[#allocation2 + $0x70] sm:$0xf]
        %856 = vst [vmem:[#allocation3] sm:$0xf] %v836
        %857 = vst [vmem:[#allocation3 + $0xc] sm:$0xf] %v837
        %858 = vst [vmem:[#allocation3 + $0x18] sm:$0xf] %v838
        %859 = vst [vmem:[#allocation3 + $0x24] sm:$0xf] %v839
        %860 = vst [vmem:[#allocation3 + $0x30] sm:$0xf] %v840
        %861 = vst [vmem:[#allocation3 + $0x3c] sm:$0xf] %v841
        %862 = vst [vmem:[#allocation3 + $0x48] sm:$0xf] %v842
        %863 = vst [vmem:[#allocation3 + $0x54] sm:$0xf] %v843
        %864 = vst [vmem:[#allocation3 + $0x60] sm:$0xf] %v844
        %865 = vst [vmem:[#allocation3 + $0x6c] sm:$0xf] %v845
        %866 = vst [vmem:[#allocation3 + $0x78] sm:$0xf] %v846
        %867 = vst [vmem:[#allocation3 + $0x84] sm:$0xf] %v847
        %868 = vst [vmem:[#allocation3 + $0x90] sm:$0xf] %v848
        %869 = vst [vmem:[#allocation3 + $0x9c] sm:$0xf] %v849
        %870 = vst [vmem:[#allocation3 + $0xa8] sm:$0xf] %v850
        %871 = vst [vmem:[#allocation3 + $0xb4] sm:$0xf] %v851
        %872 = vst [vmem:[#allocation3 + $0xc0] sm:$0xf] %v852
        %873 = vst [vmem:[#allocation3 + $0xcc] sm:$0xf] %v853
        %874 = vst [vmem:[#allocation3 + $0xd8] sm:$0xf] %v854
        %875 = vst [vmem:[#allocation3 + $0xe4] sm:$0xf] %v855
        %v876 = vld [vmem:[#allocation2] sm:$0xf]
        %v877 = vld [vmem:[#allocation2 + $0x4] sm:$0xf]
        %v878 = vld [vmem:[#allocation2 + $0x8] sm:$0x1]
        %v879 = vld [vmem:[#allocation2 + $0xc] sm:$0xf]
        %v880 = vld [vmem:[#allocation2 + $0x10] sm:$0xf]
        %v881 = vld [vmem:[#allocation2 + $0x14] sm:$0x1]
        %v882 = vld [vmem:[#allocation2 + $0x18] sm:$0xf]
        %v883 = vld [vmem:[#allocation2 + $0x1c] sm:$0xf]
        %v884 = vld [vmem:[#allocation2 + $0x20] sm:$0x1]
        %v885 = vld [vmem:[#allocation2 + $0x24] sm:$0xf]
        %v886 = vld [vmem:[#allocation2 + $0x28] sm:$0xf]
        %v887 = vld [vmem:[#allocation2 + $0x2c] sm:$0x1]
        %v888 = vld [vmem:[#allocation2 + $0x30] sm:$0xf]
        %v889 = vld [vmem:[#allocation2 + $0x34] sm:$0xf]
        %v890 = vld [vmem:[#allocation2 + $0x38] sm:$0x1]
        %v891 = vld [vmem:[#allocation2 + $0x3c] sm:$0xf]
        %v892 = vld [vmem:[#allocation2 + $0x40] sm:$0xf]
        %v893 = vld [vmem:[#allocation2 + $0x44] sm:$0x1]
        %v894 = vld [vmem:[#allocation2 + $0x48] sm:$0xf]
        %v895 = vld [vmem:[#allocation2 + $0x4c] sm:$0xf]
        %v896 = vld [vmem:[#allocation2 + $0x50] sm:$0x1]
        %v897 = vld [vmem:[#allocation2 + $0x54] sm:$0xf]
        %v898 = vld [vmem:[#allocation2 + $0x58] sm:$0xf]
        %v899 = vld [vmem:[#allocation2 + $0x5c] sm:$0x1]
        %v900 = vld [vmem:[#allocation2 + $0x60] sm:$0xf]
        %v901 = vld [vmem:[#allocation2 + $0x64] sm:$0xf]
        %v902 = vld [vmem:[#allocation2 + $0x68] sm:$0x1]
        %v903 = vld [vmem:[#allocation2 + $0x6c] sm:$0xf]
        %v904 = vld [vmem:[#allocation2 + $0x70] sm:$0xf]
        %v905 = vld [vmem:[#allocation2 + $0x74] sm:$0x1]
        %vm906 = vsmask.f32 3328
        %vm907 = vsmask.f32 7440
        %vm908 = vmor %vm906, %vm907
        %v910 = vshrl.u32 %v876, 16
        %v912 = vrot.slane %v910, 4
        %v913 = vshll.u32 %v876, 16
        %v915 = vrot.slane %v913, 5
        %v916 = vor.u32 %v912, %v915
        %v917 = vrot.slane %v916, 4
        %v919 = vshll.u32 %v877, 16
        %v921 = vrot.slane %v919, 5
        %v922 = vsel %vm908, %v917, %v921
        %v923 = vshrl.u32 %v877, 16
        %v925 = vrot.slane %v923, 4
        %v926 = vor.u32 %v925, %v921
        %v927 = vrot.slane %v926, 4
        %v929 = vshll.u32 %v878, 16
        %v931 = vrot.slane %v929, 5
        %v932 = vsel %vm908, %v927, %v931
        %v934 = vshrl.u32 %v879, 16
        %v936 = vrot.slane %v934, 4
        %v937 = vshll.u32 %v879, 16
        %v939 = vrot.slane %v937, 5
        %v940 = vor.u32 %v936, %v939
        %v941 = vrot.slane %v940, 4
        %v943 = vshll.u32 %v880, 16
        %v945 = vrot.slane %v943, 5
        %v946 = vsel %vm908, %v941, %v945
        %v947 = vshrl.u32 %v880, 16
        %v949 = vrot.slane %v947, 4
        %v950 = vor.u32 %v949, %v945
        %v951 = vrot.slane %v950, 4
        %v953 = vshll.u32 %v881, 16
        %v955 = vrot.slane %v953, 5
        %v956 = vsel %vm908, %v951, %v955
        %v958 = vshrl.u32 %v882, 16
        %v960 = vrot.slane %v958, 4
        %v961 = vshll.u32 %v882, 16
        %v963 = vrot.slane %v961, 5
        %v964 = vor.u32 %v960, %v963
        %v965 = vrot.slane %v964, 4
        %v967 = vshll.u32 %v883, 16
        %v969 = vrot.slane %v967, 5
        %v970 = vsel %vm908, %v965, %v969
        %v971 = vshrl.u32 %v883, 16
        %v973 = vrot.slane %v971, 4
        %v974 = vor.u32 %v973, %v969
        %v975 = vrot.slane %v974, 4
        %v977 = vshll.u32 %v884, 16
        %v979 = vrot.slane %v977, 5
        %v980 = vsel %vm908, %v975, %v979
        %v982 = vshrl.u32 %v885, 16
        %v984 = vrot.slane %v982, 4
        %v985 = vshll.u32 %v885, 16
        %v987 = vrot.slane %v985, 5
        %v988 = vor.u32 %v984, %v987
        %v989 = vrot.slane %v988, 4
        %v991 = vshll.u32 %v886, 16
        %v993 = vrot.slane %v991, 5
        %v994 = vsel %vm908, %v989, %v993
        %v995 = vshrl.u32 %v886, 16
        %v997 = vrot.slane %v995, 4
        %v998 = vor.u32 %v997, %v993
        %v999 = vrot.slane %v998, 4
        %v1001 = vshll.u32 %v887, 16
        %v1003 = vrot.slane %v1001, 5
        %v1004 = vsel %vm908, %v999, %v1003
        %v1006 = vshrl.u32 %v888, 16
        %v1008 = vrot.slane %v1006, 4
        %v1009 = vshll.u32 %v888, 16
        %v1011 = vrot.slane %v1009, 5
        %v1012 = vor.u32 %v1008, %v1011
        %v1013 = vrot.slane %v1012, 4
        %v1015 = vshll.u32 %v889, 16
        %v1017 = vrot.slane %v1015, 5
        %v1018 = vsel %vm908, %v1013, %v1017
        %v1019 = vshrl.u32 %v889, 16
        %v1021 = vrot.slane %v1019, 4
        %v1022 = vor.u32 %v1021, %v1017
        %v1023 = vrot.slane %v1022, 4
        %v1025 = vshll.u32 %v890, 16
        %v1027 = vrot.slane %v1025, 5
        %v1028 = vsel %vm908, %v1023, %v1027
        %v1030 = vshrl.u32 %v891, 16
        %v1032 = vrot.slane %v1030, 4
        %v1033 = vshll.u32 %v891, 16
        %v1035 = vrot.slane %v1033, 5
        %v1036 = vor.u32 %v1032, %v1035
        %v1037 = vrot.slane %v1036, 4
        %v1039 = vshll.u32 %v892, 16
        %v1041 = vrot.slane %v1039, 5
        %v1042 = vsel %vm908, %v1037, %v1041
        %v1043 = vshrl.u32 %v892, 16
        %v1045 = vrot.slane %v1043, 4
        %v1046 = vor.u32 %v1045, %v1041
        %v1047 = vrot.slane %v1046, 4
        %v1049 = vshll.u32 %v893, 16
        %v1051 = vrot.slane %v1049, 5
        %v1052 = vsel %vm908, %v1047, %v1051
        %v1054 = vshrl.u32 %v894, 16
        %v1056 = vrot.slane %v1054, 4
        %v1057 = vshll.u32 %v894, 16
        %v1059 = vrot.slane %v1057, 5
        %v1060 = vor.u32 %v1056, %v1059
        %v1061 = vrot.slane %v1060, 4
        %v1063 = vshll.u32 %v895, 16
        %v1065 = vrot.slane %v1063, 5
        %v1066 = vsel %vm908, %v1061, %v1065
        %v1067 = vshrl.u32 %v895, 16
        %v1069 = vrot.slane %v1067, 4
        %v1070 = vor.u32 %v1069, %v1065
        %v1071 = vrot.slane %v1070, 4
        %v1073 = vshll.u32 %v896, 16
        %v1075 = vrot.slane %v1073, 5
        %v1076 = vsel %vm908, %v1071, %v1075
        %v1078 = vshrl.u32 %v897, 16
        %v1080 = vrot.slane %v1078, 4
        %v1081 = vshll.u32 %v897, 16
        %v1083 = vrot.slane %v1081, 5
        %v1084 = vor.u32 %v1080, %v1083
        %v1085 = vrot.slane %v1084, 4
        %v1087 = vshll.u32 %v898, 16
        %v1089 = vrot.slane %v1087, 5
        %v1090 = vsel %vm908, %v1085, %v1089
        %v1091 = vshrl.u32 %v898, 16
        %v1093 = vrot.slane %v1091, 4
        %v1094 = vor.u32 %v1093, %v1089
        %v1095 = vrot.slane %v1094, 4
        %v1097 = vshll.u32 %v899, 16
        %v1099 = vrot.slane %v1097, 5
        %v1100 = vsel %vm908, %v1095, %v1099
        %v1102 = vshrl.u32 %v900, 16
        %v1104 = vrot.slane %v1102, 4
        %v1105 = vshll.u32 %v900, 16
        %v1107 = vrot.slane %v1105, 5
        %v1108 = vor.u32 %v1104, %v1107
        %v1109 = vrot.slane %v1108, 4
        %v1111 = vshll.u32 %v901, 16
        %v1113 = vrot.slane %v1111, 5
        %v1114 = vsel %vm908, %v1109, %v1113
        %v1115 = vshrl.u32 %v901, 16
        %v1117 = vrot.slane %v1115, 4
        %v1118 = vor.u32 %v1117, %v1113
        %v1119 = vrot.slane %v1118, 4
        %v1121 = vshll.u32 %v902, 16
        %v1123 = vrot.slane %v1121, 5
        %v1124 = vsel %vm908, %v1119, %v1123
        %v1126 = vshrl.u32 %v903, 16
        %v1128 = vrot.slane %v1126, 4
        %v1129 = vshll.u32 %v903, 16
        %v1131 = vrot.slane %v1129, 5
        %v1132 = vor.u32 %v1128, %v1131
        %v1133 = vrot.slane %v1132, 4
        %v1135 = vshll.u32 %v904, 16
        %v1137 = vrot.slane %v1135, 5
        %v1138 = vsel %vm908, %v1133, %v1137
        %v1139 = vshrl.u32 %v904, 16
        %v1141 = vrot.slane %v1139, 4
        %v1142 = vor.u32 %v1141, %v1137
        %v1143 = vrot.slane %v1142, 4
        %v1145 = vshll.u32 %v905, 16
        %v1147 = vrot.slane %v1145, 5
        %v1148 = vsel %vm908, %v1143, %v1147
        %1169 = vst [vmem:[#allocation3 + $0x4] sm:$0xf] %v922
        %1170 = vst [vmem:[#allocation3 + $0x10] sm:$0xf] %v932
        %1171 = vst [vmem:[#allocation3 + $0x1c] sm:$0xf] %v946
        %1172 = vst [vmem:[#allocation3 + $0x28] sm:$0xf] %v956
        %1173 = vst [vmem:[#allocation3 + $0x34] sm:$0xf] %v970
        %1174 = vst [vmem:[#allocation3 + $0x40] sm:$0xf] %v980
        %1175 = vst [vmem:[#allocation3 + $0x4c] sm:$0xf] %v994
        %1176 = vst [vmem:[#allocation3 + $0x58] sm:$0xf] %v1004
        %1177 = vst [vmem:[#allocation3 + $0x64] sm:$0xf] %v1018
        %1178 = vst [vmem:[#allocation3 + $0x70] sm:$0xf] %v1028
        %1179 = vst [vmem:[#allocation3 + $0x7c] sm:$0xf] %v1042
        %1180 = vst [vmem:[#allocation3 + $0x88] sm:$0xf] %v1052
        %1181 = vst [vmem:[#allocation3 + $0x94] sm:$0xf] %v1066
        %1182 = vst [vmem:[#allocation3 + $0xa0] sm:$0xf] %v1076
        %1183 = vst [vmem:[#allocation3 + $0xac] sm:$0xf] %v1090
        %1184 = vst [vmem:[#allocation3 + $0xb8] sm:$0xf] %v1100
        %1185 = vst [vmem:[#allocation3 + $0xc4] sm:$0xf] %v1114
        %1186 = vst [vmem:[#allocation3 + $0xd0] sm:$0xf] %v1124
        %1187 = vst [vmem:[#allocation3 + $0xdc] sm:$0xf] %v1138
        %1188 = vst [vmem:[#allocation3 + $0xe8] sm:$0xf] %v1148
        %v1189 = vld [vmem:[#allocation2] sm:$0xe]
        %v1190 = vld [vmem:[#allocation2 + $0x4] sm:$0xf]
        %v1191 = vld [vmem:[#allocation2 + $0x8] sm:$0x1]
        %v1192 = vld [vmem:[#allocation2 + $0xc] sm:$0xe]
        %v1193 = vld [vmem:[#allocation2 + $0x10] sm:$0xf]
        %v1194 = vld [vmem:[#allocation2 + $0x14] sm:$0x1]
        %v1195 = vld [vmem:[#allocation2 + $0x18] sm:$0xe]
        %v1196 = vld [vmem:[#allocation2 + $0x1c] sm:$0xf]
        %v1197 = vld [vmem:[#allocation2 + $0x20] sm:$0x1]
        %v1198 = vld [vmem:[#allocation2 + $0x24] sm:$0xe]
        %v1199 = vld [vmem:[#allocation2 + $0x28] sm:$0xf]
        %v1200 = vld [vmem:[#allocation2 + $0x2c] sm:$0x1]
        %v1201 = vld [vmem:[#allocation2 + $0x30] sm:$0xe]
        %v1202 = vld [vmem:[#allocation2 + $0x34] sm:$0xf]
        %v1203 = vld [vmem:[#allocation2 + $0x38] sm:$0x1]
        %v1204 = vld [vmem:[#allocation2 + $0x3c] sm:$0xe]
        %v1205 = vld [vmem:[#allocation2 + $0x40] sm:$0xf]
        %v1206 = vld [vmem:[#allocation2 + $0x44] sm:$0x1]
        %v1207 = vld [vmem:[#allocation2 + $0x48] sm:$0xe]
        %v1208 = vld [vmem:[#allocation2 + $0x4c] sm:$0xf]
        %v1209 = vld [vmem:[#allocation2 + $0x50] sm:$0x1]
        %v1210 = vld [vmem:[#allocation2 + $0x54] sm:$0xe]
        %v1211 = vld [vmem:[#allocation2 + $0x58] sm:$0xf]
        %v1212 = vld [vmem:[#allocation2 + $0x5c] sm:$0x1]
        %v1213 = vld [vmem:[#allocation2 + $0x60] sm:$0xe]
        %v1214 = vld [vmem:[#allocation2 + $0x64] sm:$0xf]
        %v1215 = vld [vmem:[#allocation2 + $0x68] sm:$0x1]
        %v1216 = vld [vmem:[#allocation2 + $0x6c] sm:$0xe]
        %v1217 = vld [vmem:[#allocation2 + $0x70] sm:$0xf]
        %v1218 = vld [vmem:[#allocation2 + $0x74] sm:$0x1]
        %vm1249 = vcmask 1042432
        %vm1250 = vcmask 1046532
        %vm1251 = vmor %vm1249, %vm1250
        %v1252 = vrot.slane %v1189, 5
        %v1253 = vrot.slane %v1252, 4
        %v1254 = vrot.slane %v1190, 5
        %v1255 = vsel %vm1251, %v1253, %v1254
        %v1256 = vrot.slane %v1254, 4
        %v1257 = vrot.slane %v1191, 5
        %v1258 = vsel %vm1251, %v1256, %v1257
        %v1259 = vrot.slane %v1192, 5
        %v1260 = vrot.slane %v1259, 4
        %v1261 = vrot.slane %v1193, 5
        %v1262 = vsel %vm1251, %v1260, %v1261
        %v1263 = vrot.slane %v1261, 4
        %v1264 = vrot.slane %v1194, 5
        %v1265 = vsel %vm1251, %v1263, %v1264
        %v1266 = vrot.slane %v1195, 5
        %v1267 = vrot.slane %v1266, 4
        %v1268 = vrot.slane %v1196, 5
        %v1269 = vsel %vm1251, %v1267, %v1268
        %v1270 = vrot.slane %v1268, 4
        %v1271 = vrot.slane %v1197, 5
        %v1272 = vsel %vm1251, %v1270, %v1271
        %v1273 = vrot.slane %v1198, 5
        %v1274 = vrot.slane %v1273, 4
        %v1275 = vrot.slane %v1199, 5
        %v1276 = vsel %vm1251, %v1274, %v1275
        %v1277 = vrot.slane %v1275, 4
        %v1278 = vrot.slane %v1200, 5
        %v1279 = vsel %vm1251, %v1277, %v1278
        %v1280 = vrot.slane %v1201, 5
        %v1281 = vrot.slane %v1280, 4
        %v1282 = vrot.slane %v1202, 5
        %v1283 = vsel %vm1251, %v1281, %v1282
        %v1284 = vrot.slane %v1282, 4
        %v1285 = vrot.slane %v1203, 5
        %v1286 = vsel %vm1251, %v1284, %v1285
        %v1287 = vrot.slane %v1204, 5
        %v1288 = vrot.slane %v1287, 4
        %v1289 = vrot.slane %v1205, 5
        %v1290 = vsel %vm1251, %v1288, %v1289
        %v1291 = vrot.slane %v1289, 4
        %v1292 = vrot.slane %v1206, 5
        %v1293 = vsel %vm1251, %v1291, %v1292
        %v1294 = vrot.slane %v1207, 5
        %v1295 = vrot.slane %v1294, 4
        %v1296 = vrot.slane %v1208, 5
        %v1297 = vsel %vm1251, %v1295, %v1296
        %v1298 = vrot.slane %v1296, 4
        %v1299 = vrot.slane %v1209, 5
        %v1300 = vsel %vm1251, %v1298, %v1299
        %v1301 = vrot.slane %v1210, 5
        %v1302 = vrot.slane %v1301, 4
        %v1303 = vrot.slane %v1211, 5
        %v1304 = vsel %vm1251, %v1302, %v1303
        %v1305 = vrot.slane %v1303, 4
        %v1306 = vrot.slane %v1212, 5
        %v1307 = vsel %vm1251, %v1305, %v1306
        %v1308 = vrot.slane %v1213, 5
        %v1309 = vrot.slane %v1308, 4
        %v1310 = vrot.slane %v1214, 5
        %v1311 = vsel %vm1251, %v1309, %v1310
        %v1312 = vrot.slane %v1310, 4
        %v1313 = vrot.slane %v1215, 5
        %v1314 = vsel %vm1251, %v1312, %v1313
        %v1315 = vrot.slane %v1216, 5
        %v1316 = vrot.slane %v1315, 4
        %v1317 = vrot.slane %v1217, 5
        %v1318 = vsel %vm1251, %v1316, %v1317
        %v1319 = vrot.slane %v1317, 4
        %v1320 = vrot.slane %v1218, 5
        %v1321 = vsel %vm1251, %v1319, %v1320
        %1342 = vst [vmem:[#allocation3 + $0x8] sm:$0xf] %v1255
        %1343 = vst [vmem:[#allocation3 + $0x14] sm:$0xf] %v1258
        %1344 = vst [vmem:[#allocation3 + $0x20] sm:$0xf] %v1262
        %1345 = vst [vmem:[#allocation3 + $0x2c] sm:$0xf] %v1265
        %1346 = vst [vmem:[#allocation3 + $0x38] sm:$0xf] %v1269
        %1347 = vst [vmem:[#allocation3 + $0x44] sm:$0xf] %v1272
        %1348 = vst [vmem:[#allocation3 + $0x50] sm:$0xf] %v1276
        %1349 = vst [vmem:[#allocation3 + $0x5c] sm:$0xf] %v1279
        %1350 = vst [vmem:[#allocation3 + $0x68] sm:$0xf] %v1283
        %1351 = vst [vmem:[#allocation3 + $0x74] sm:$0xf] %v1286
        %1352 = vst [vmem:[#allocation3 + $0x80] sm:$0xf] %v1290
        %1353 = vst [vmem:[#allocation3 + $0x8c] sm:$0xf] %v1293
        %1354 = vst [vmem:[#allocation3 + $0x98] sm:$0xf] %v1297
        %1355 = vst [vmem:[#allocation3 + $0xa4] sm:$0xf] %v1300
        %1356 = vst [vmem:[#allocation3 + $0xb0] sm:$0xf] %v1304
        %1357 = vst [vmem:[#allocation3 + $0xbc] sm:$0xf] %v1307
        %1358 = vst [vmem:[#allocation3 + $0xc8] sm:$0xf] %v1311
        %1359 = vst [vmem:[#allocation3 + $0xd4] sm:$0xf] %v1314
        %1360 = vst [vmem:[#allocation3 + $0xe0] sm:$0xf] %v1318
        %1361 = vst [vmem:[#allocation3 + $0xec] sm:$0xf] %v1321
        %v1362 = vld [vmem:[#allocation3] sm:$0xff]
        %v1363 = vld [vmem:[#allocation3 + $0x8] sm:$0xf]
        %v1364 = vld [vmem:[#allocation3 + $0xc] sm:$0xff]
        %v1365 = vld [vmem:[#allocation3 + $0x14] sm:$0xf]
        %v1366 = vld [vmem:[#allocation3 + $0x18] sm:$0xff]
        %v1367 = vld [vmem:[#allocation3 + $0x20] sm:$0xf]
        %v1368 = vld [vmem:[#allocation3 + $0x24] sm:$0xff]
        %v1369 = vld [vmem:[#allocation3 + $0x2c] sm:$0xf]
        %v1370 = vld [vmem:[#allocation3 + $0x30] sm:$0xff]
        %v1371 = vld [vmem:[#allocation3 + $0x38] sm:$0xf]
        %v1372 = vld [vmem:[#allocation3 + $0x3c] sm:$0xff]
        %v1373 = vld [vmem:[#allocation3 + $0x44] sm:$0xf]
        %v1374 = vld [vmem:[#allocation3 + $0x48] sm:$0xff]
        %v1375 = vld [vmem:[#allocation3 + $0x50] sm:$0xf]
        %v1376 = vld [vmem:[#allocation3 + $0x54] sm:$0xff]
        %v1377 = vld [vmem:[#allocation3 + $0x5c] sm:$0xf]
        %v1378 = vld [vmem:[#allocation3 + $0x60] sm:$0xff]
        %v1379 = vld [vmem:[#allocation3 + $0x68] sm:$0xf]
        %v1380 = vld [vmem:[#allocation3 + $0x6c] sm:$0xff]
        %v1381 = vld [vmem:[#allocation3 + $0x74] sm:$0xf]
        %v1382 = vld [vmem:[#allocation3 + $0x78] sm:$0xff]
        %v1383 = vld [vmem:[#allocation3 + $0x80] sm:$0xf]
        %v1384 = vld [vmem:[#allocation3 + $0x84] sm:$0xff]
        %v1385 = vld [vmem:[#allocation3 + $0x8c] sm:$0xf]
        %v1386 = vld [vmem:[#allocation3 + $0x90] sm:$0xff]
        %v1387 = vld [vmem:[#allocation3 + $0x98] sm:$0xf]
        %v1388 = vld [vmem:[#allocation3 + $0x9c] sm:$0xff]
        %v1389 = vld [vmem:[#allocation3 + $0xa4] sm:$0xf]
        %v1390 = vld [vmem:[#allocation3 + $0xa8] sm:$0xff]
        %v1391 = vld [vmem:[#allocation3 + $0xb0] sm:$0xf]
        %v1392 = vld [vmem:[#allocation3 + $0xb4] sm:$0xff]
        %v1393 = vld [vmem:[#allocation3 + $0xbc] sm:$0xf]
        %v1394 = vld [vmem:[#allocation10] sm:$0xf]
        %v1395 = vld [vmem:[#allocation10 + $0x4] sm:$0xf]
        %v1396 = vld [vmem:[#allocation10 + $0x8] sm:$0xf]
        %v1397 = vld [vmem:[#allocation10 + $0xc] sm:$0xf]
        %v1398 = vld [vmem:[#allocation10 + $0x10] sm:$0xf]
        %v1399 = vld [vmem:[#allocation10 + $0x14] sm:$0xf]
        %v1400 = vld [vmem:[#allocation10 + $0x18] sm:$0xf]
        %v1401 = vld [vmem:[#allocation10 + $0x1c] sm:$0xf]
        %v1402 = vld [vmem:[#allocation10 + $0x20] sm:$0xf]
        %v1403 = vld [vmem:[#allocation10 + $0x24] sm:$0xf]
        %v1404 = vld [vmem:[#allocation10 + $0x28] sm:$0xf]
        %v1405 = vld [vmem:[#allocation10 + $0x2c] sm:$0xf]
        %v1406 = vld [vmem:[#allocation10 + $0x30] sm:$0xf]
        %v1407 = vld [vmem:[#allocation10 + $0x34] sm:$0xf]
        %v1408 = vld [vmem:[#allocation10 + $0x38] sm:$0xf]
        %v1409 = vld [vmem:[#allocation10 + $0x3c] sm:$0xf]
        %v1410 = vld [vmem:[#allocation10 + $0x40] sm:$0xf]
        %v1411 = vld [vmem:[#allocation10 + $0x44] sm:$0xf]
        %v1412 = vld [vmem:[#allocation10 + $0x48] sm:$0xf]
        %v1413 = vld [vmem:[#allocation10 + $0x4c] sm:$0xf]
        %v1414 = vld [vmem:[#allocation10 + $0x50] sm:$0xf]
        %v1415 = vld [vmem:[#allocation10 + $0x54] sm:$0xf]
        %v1416 = vld [vmem:[#allocation10 + $0x58] sm:$0xf]
        %v1417 = vld [vmem:[#allocation10 + $0x5c] sm:$0xf]
        %v1418 = vld [vmem:[#allocation10 + $0x60] sm:$0xf]
        %v1419 = vld [vmem:[#allocation10 + $0x64] sm:$0xf]
        %v1420 = vld [vmem:[#allocation10 + $0x68] sm:$0xf]
        %v1421 = vld [vmem:[#allocation10 + $0x6c] sm:$0xf]
        %v1422 = vld [vmem:[#allocation10 + $0x70] sm:$0xf]
        %v1423 = vld [vmem:[#allocation10 + $0x74] sm:$0xf]
        %v1424 = vld [vmem:[#allocation10 + $0x78] sm:$0xf]
        %v1425 = vld [vmem:[#allocation10 + $0x7c] sm:$0xf]
        %v1426 = vld [vmem:[#allocation10 + $0x80] sm:$0xf]
        %v1427 = vld [vmem:[#allocation10 + $0x84] sm:$0xf]
        %v1428 = vld [vmem:[#allocation10 + $0x88] sm:$0xf]
        %v1429 = vld [vmem:[#allocation10 + $0x8c] sm:$0xf]
        %v1430 = vld [vmem:[#allocation10 + $0x90] sm:$0xf]
        %v1431 = vld [vmem:[#allocation10 + $0x94] sm:$0xf]
        %v1432 = vld [vmem:[#allocation10 + $0x98] sm:$0xf]
        %v1433 = vld [vmem:[#allocation10 + $0x9c] sm:$0xf]
        %v1434 = vld [vmem:[#allocation10 + $0xa0] sm:$0xf]
        %v1435 = vld [vmem:[#allocation10 + $0xa4] sm:$0xf]
        %v1436 = vld [vmem:[#allocation10 + $0xa8] sm:$0xf]
        %v1437 = vld [vmem:[#allocation10 + $0xac] sm:$0xf]
        %v1438 = vld [vmem:[#allocation10 + $0xb0] sm:$0xf]
        %v1439 = vld [vmem:[#allocation10 + $0xb4] sm:$0xf]
        %v1440 = vld [vmem:[#allocation10 + $0xb8] sm:$0xf]
        %v1441 = vld [vmem:[#allocation10 + $0xbc] sm:$0xf]
        %v1442 = vld [vmem:[#allocation3 + $0xc0] sm:$0xff]
        %v1443 = vld [vmem:[#allocation3 + $0xc8] sm:$0xf]
        %v1444 = vld [vmem:[#allocation3 + $0xcc] sm:$0xff]
        %v1445 = vld [vmem:[#allocation3 + $0xd4] sm:$0xf]
        %s1446 = scalar_lea.vmem [#allocation10], 192
        %v1447 = vld [vmem:[%s1446] sm:$0xf]
        %v1448 = vld [vmem:[%s1446 + $0x4] sm:$0xf]
        %v1449 = vld [vmem:[%s1446 + $0x8] sm:$0xf]
        %v1450 = vld [vmem:[%s1446 + $0xc] sm:$0xf]
        %v1451 = vld [vmem:[%s1446 + $0x10] sm:$0xf]
        %v1452 = vld [vmem:[%s1446 + $0x14] sm:$0xf]
        %v1453 = vld [vmem:[%s1446 + $0x18] sm:$0xf]
        %v1454 = vld [vmem:[%s1446 + $0x1c] sm:$0xf]
        %v1455 = vld [vmem:[%s1446 + $0x20] sm:$0xf]
        %v1456 = vld [vmem:[%s1446 + $0x24] sm:$0xf]
        %v1457 = vld [vmem:[%s1446 + $0x28] sm:$0xf]
        %v1458 = vld [vmem:[%s1446 + $0x2c] sm:$0xf]
        %v1459 = vld [vmem:[%s1446 + $0x30] sm:$0xf]
        %v1460 = vld [vmem:[%s1446 + $0x34] sm:$0xf]
        %v1461 = vld [vmem:[%s1446 + $0x38] sm:$0xf]
        %v1462 = vld [vmem:[%s1446 + $0x3c] sm:$0xf]
        %v1463 = vld [vmem:[%s1446 + $0x40] sm:$0xf]
        %v1464 = vld [vmem:[%s1446 + $0x44] sm:$0xf]
        %v1465 = vld [vmem:[%s1446 + $0x48] sm:$0xf]
        %v1466 = vld [vmem:[%s1446 + $0x4c] sm:$0xf]
        %v1467 = vld [vmem:[%s1446 + $0x50] sm:$0xf]
        %v1468 = vld [vmem:[%s1446 + $0x54] sm:$0xf]
        %v1469 = vld [vmem:[%s1446 + $0x58] sm:$0xf]
        %v1470 = vld [vmem:[%s1446 + $0x5c] sm:$0xf]
        %v1471 = vld [vmem:[%s1446 + $0x60] sm:$0xf]
        %v1472 = vld [vmem:[%s1446 + $0x64] sm:$0xf]
        %v1473 = vld [vmem:[%s1446 + $0x68] sm:$0xf]
        %v1474 = vld [vmem:[%s1446 + $0x6c] sm:$0xf]
        %v1475 = vld [vmem:[%s1446 + $0x70] sm:$0xf]
        %v1476 = vld [vmem:[%s1446 + $0x74] sm:$0xf]
        %v1477 = vld [vmem:[%s1446 + $0x78] sm:$0xf]
        %v1478 = vld [vmem:[%s1446 + $0x7c] sm:$0xf]
        %v1479 = vld [vmem:[%s1446 + $0x80] sm:$0xf]
        %v1480 = vld [vmem:[%s1446 + $0x84] sm:$0xf]
        %v1481 = vld [vmem:[%s1446 + $0x88] sm:$0xf]
        %v1482 = vld [vmem:[%s1446 + $0x8c] sm:$0xf]
        %v1483 = vld [vmem:[%s1446 + $0x90] sm:$0xf]
        %v1484 = vld [vmem:[%s1446 + $0x94] sm:$0xf]
        %v1485 = vld [vmem:[%s1446 + $0x98] sm:$0xf]
        %v1486 = vld [vmem:[%s1446 + $0x9c] sm:$0xf]
        %v1487 = vld [vmem:[%s1446 + $0xa0] sm:$0xf]
        %v1488 = vld [vmem:[%s1446 + $0xa4] sm:$0xf]
        %v1489 = vld [vmem:[%s1446 + $0xa8] sm:$0xf]
        %v1490 = vld [vmem:[%s1446 + $0xac] sm:$0xf]
        %v1491 = vld [vmem:[%s1446 + $0xb0] sm:$0xf]
        %v1492 = vld [vmem:[%s1446 + $0xb4] sm:$0xf]
        %v1493 = vld [vmem:[%s1446 + $0xb8] sm:$0xf]
        %v1494 = vld [vmem:[%s1446 + $0xbc] sm:$0xf]
        %v1527 = vunpack.c.l.b16 %v1366
        %v1528 = vunpack.c.h.b16 %v1366
        %v1529 = vunpack.c.l.b16 %v1367
        %v1530 = vunpack.c.l.b16 %v1368
        %v1531 = vunpack.c.h.b16 %v1368
        %v1532 = vunpack.c.l.b16 %v1369
        %v1533 = vunpack.c.l.b16 %v1370
        %v1534 = vunpack.c.h.b16 %v1370
        %v1535 = vunpack.c.l.b16 %v1371
        %v1536 = vunpack.c.l.b16 %v1372
        %v1537 = vunpack.c.h.b16 %v1372
        %v1538 = vunpack.c.l.b16 %v1373
        %v1539 = vunpack.c.l.b16 %v1374
        %v1540 = vunpack.c.h.b16 %v1374
        %v1541 = vunpack.c.l.b16 %v1375
        %v1542 = vunpack.c.l.b16 %v1376
        %v1543 = vunpack.c.h.b16 %v1376
        %v1544 = vunpack.c.l.b16 %v1377
        %v1545 = vunpack.c.l.b16 %v1378
        %v1546 = vunpack.c.h.b16 %v1378
        %v1547 = vunpack.c.l.b16 %v1379
        %v1548 = vunpack.c.l.b16 %v1380
        %v1549 = vunpack.c.h.b16 %v1380
        %v1550 = vunpack.c.l.b16 %v1381
        %v1551 = vunpack.c.l.b16 %v1382
        %v1552 = vunpack.c.h.b16 %v1382
        %v1553 = vunpack.c.l.b16 %v1383
        %v1554 = vunpack.c.l.b16 %v1384
        %v1555 = vunpack.c.h.b16 %v1384
        %v1556 = vunpack.c.l.b16 %v1385
        %v1557 = vunpack.c.l.b16 %v1386
        %v1558 = vunpack.c.h.b16 %v1386
        %v1559 = vunpack.c.l.b16 %v1387
        %v1560 = vunpack.c.l.b16 %v1388
        %v1561 = vunpack.c.h.b16 %v1388
        %v1562 = vunpack.c.l.b16 %v1389
        %v1563 = vunpack.c.l.b16 %v1390
        %v1564 = vunpack.c.h.b16 %v1390
        %v1565 = vunpack.c.l.b16 %v1391
        %v1566 = vunpack.c.l.b16 %v1392
        %v1567 = vunpack.c.h.b16 %v1392
        %v1568 = vunpack.c.l.b16 %v1393
        %v1569 = vunpack.c.l.b16 %v1442
        %v1570 = vunpack.c.h.b16 %v1442
        %v1571 = vunpack.c.l.b16 %v1443
        %v1572 = vunpack.c.l.b16 %v1444
        %v1573 = vunpack.c.h.b16 %v1444
        %v1574 = vunpack.c.l.b16 %v1445
        %v1575 = vpack.c.b16 %v1530, %v1527
        %v1576 = vpack.c.b16 %v1531, %v1528
        %v1577 = vpack.c.b16 %v1532, %v1529
        %v1578 = vpack.c.b16 %v1536, %v1533
        %v1579 = vpack.c.b16 %v1537, %v1534
        %v1580 = vpack.c.b16 %v1538, %v1535
        %v1581 = vpack.c.b16 %v1542, %v1539
        %v1582 = vpack.c.b16 %v1543, %v1540
        %v1583 = vpack.c.b16 %v1544, %v1541
        %v1584 = vpack.c.b16 %v1548, %v1545
        %v1585 = vpack.c.b16 %v1549, %v1546
        %v1586 = vpack.c.b16 %v1550, %v1547
        %v1587 = vpack.c.b16 %v1554, %v1551
        %v1588 = vpack.c.b16 %v1555, %v1552
        %v1589 = vpack.c.b16 %v1556, %v1553
        %v1590 = vpack.c.b16 %v1560, %v1557
        %v1591 = vpack.c.b16 %v1561, %v1558
        %v1592 = vpack.c.b16 %v1562, %v1559
        %v1593 = vpack.c.b16 %v1566, %v1563
        %v1594 = vpack.c.b16 %v1567, %v1564
        %v1595 = vpack.c.b16 %v1568, %v1565
        %v1596 = vpack.c.b16 %v1572, %v1569
        %v1597 = vpack.c.b16 %v1573, %v1570
        %v1598 = vpack.c.b16 %v1574, %v1571
        %v1671 = vunpack.c.l.b16 %v1447
        %v1672 = vunpack.c.l.b16 %v1448
        %v1673 = vunpack.c.l.b16 %v1449
        %v1674 = vunpack.c.l.b16 %v1450
        %v1675 = vunpack.c.l.b16 %v1451
        %v1676 = vunpack.c.l.b16 %v1452
        %v1677 = vunpack.c.l.b16 %v1453
        %v1678 = vunpack.c.l.b16 %v1454
        %v1679 = vunpack.c.l.b16 %v1455
        %v1680 = vunpack.c.l.b16 %v1456
        %v1681 = vunpack.c.l.b16 %v1457
        %v1682 = vunpack.c.l.b16 %v1458
        %v1683 = vunpack.c.l.b16 %v1459
        %v1684 = vunpack.c.l.b16 %v1460
        %v1685 = vunpack.c.l.b16 %v1461
        %v1686 = vunpack.c.l.b16 %v1462
        %v1687 = vunpack.c.l.b16 %v1463
        %v1688 = vunpack.c.l.b16 %v1464
        %v1689 = vunpack.c.l.b16 %v1465
        %v1690 = vunpack.c.l.b16 %v1466
        %v1691 = vunpack.c.l.b16 %v1467
        %v1692 = vunpack.c.l.b16 %v1468
        %v1693 = vunpack.c.l.b16 %v1469
        %v1694 = vunpack.c.l.b16 %v1470
        %v1695 = vunpack.c.l.b16 %v1471
        %v1696 = vunpack.c.l.b16 %v1472
        %v1697 = vunpack.c.l.b16 %v1473
        %v1698 = vunpack.c.l.b16 %v1474
        %v1699 = vunpack.c.l.b16 %v1475
        %v1700 = vunpack.c.l.b16 %v1476
        %v1701 = vunpack.c.l.b16 %v1477
        %v1702 = vunpack.c.l.b16 %v1478
        %v1703 = vunpack.c.l.b16 %v1479
        %v1704 = vunpack.c.l.b16 %v1480
        %v1705 = vunpack.c.l.b16 %v1481
        %v1706 = vunpack.c.l.b16 %v1482
        %v1707 = vunpack.c.l.b16 %v1483
        %v1708 = vunpack.c.l.b16 %v1484
        %v1709 = vunpack.c.l.b16 %v1485
        %v1710 = vunpack.c.l.b16 %v1486
        %v1711 = vunpack.c.l.b16 %v1487
        %v1712 = vunpack.c.l.b16 %v1488
        %v1713 = vunpack.c.l.b16 %v1489
        %v1714 = vunpack.c.l.b16 %v1490
        %v1715 = vunpack.c.l.b16 %v1491
        %v1716 = vunpack.c.l.b16 %v1492
        %v1717 = vunpack.c.l.b16 %v1493
        %v1718 = vunpack.c.l.b16 %v1494
        %v1719 = vpack.c.b16 %v1672, %v1671
        %v1720 = vpack.c.b16 %v1674, %v1673
        %v1721 = vpack.c.b16 %v1676, %v1675
        %v1722 = vpack.c.b16 %v1678, %v1677
        %v1723 = vpack.c.b16 %v1680, %v1679
        %v1724 = vpack.c.b16 %v1682, %v1681
        %v1725 = vpack.c.b16 %v1684, %v1683
        %v1726 = vpack.c.b16 %v1686, %v1685
        %v1727 = vpack.c.b16 %v1688, %v1687
        %v1728 = vpack.c.b16 %v1690, %v1689
        %v1729 = vpack.c.b16 %v1692, %v1691
        %v1730 = vpack.c.b16 %v1694, %v1693
        %v1731 = vpack.c.b16 %v1696, %v1695
        %v1732 = vpack.c.b16 %v1698, %v1697
        %v1733 = vpack.c.b16 %v1700, %v1699
        %v1734 = vpack.c.b16 %v1702, %v1701
        %v1735 = vpack.c.b16 %v1704, %v1703
        %v1736 = vpack.c.b16 %v1706, %v1705
        %v1737 = vpack.c.b16 %v1708, %v1707
        %v1738 = vpack.c.b16 %v1710, %v1709
        %v1739 = vpack.c.b16 %v1712, %v1711
        %v1740 = vpack.c.b16 %v1714, %v1713
        %v1741 = vpack.c.b16 %v1716, %v1715
        %v1742 = vpack.c.b16 %v1718, %v1717
        %1767 = vmatprep.subr.bf16.mxu0 0
        %1768 = vmatpush1.bf16.msra.mxu0 %v1726
        %1769 = vmatprep.subr.bf16.mxu0 0
        %1770 = vmatpush1.bf16.msra.mxu0 %v1725
        %1771 = vmatprep.subr.bf16.mxu0 0
        %1772 = vmatpush1.bf16.msra.mxu0 %v1724
        %1773 = vmatprep.subr.bf16.mxu0 0
        %1774 = vmatpush1.bf16.msra.mxu0 %v1723
        %1775 = vmatprep.subr.bf16.mxu0 0
        %1776 = vmatpush1.bf16.msra.mxu0 %v1722
        %1777 = vmatprep.subr.bf16.mxu0 0
        %1778 = vmatpush1.bf16.msra.mxu0 %v1721
        %1779 = vmatprep.subr.bf16.mxu0 0
        %1780 = vmatpush1.bf16.msra.mxu0 %v1720
        %1781 = vmatprep.subr.bf16.mxu0 0
        %1782 = vmatpush1.bf16.msra.mxu0 %v1719
        %1783 = vmatprep.subr.bf16.mxu0 0
        %1784 = vmatpush2.bf16.msra.mxu0 %v1734
        %1785 = vmatprep.subr.bf16.mxu0 0
        %1786 = vmatpush2.bf16.msra.mxu0 %v1733
        %1787 = vmatprep.subr.bf16.mxu0 0
        %1788 = vmatpush2.bf16.msra.mxu0 %v1732
        %1789 = vmatprep.subr.bf16.mxu0 0
        %1790 = vmatpush2.bf16.msra.mxu0 %v1731
        %1791 = vmatprep.subr.bf16.mxu0 0
        %1792 = vmatpush2.bf16.msra.mxu0 %v1730
        %1793 = vmatprep.subr.bf16.mxu0 0
        %1794 = vmatpush2.bf16.msra.mxu0 %v1729
        %1795 = vmatprep.subr.bf16.mxu0 0
        %1796 = vmatpush2.bf16.msra.mxu0 %v1728
        %1797 = vmatprep.subr.bf16.mxu0 0
        %1798 = vmatpush2.bf16.msra.mxu0 %v1727
        %1799 = vmatprep.mubr.bf16.mxu0 %v1576
        %1800 = vmatmul.mubr.bf16.gmra.mxu0 %v1575
        %v1801 = vpop.f32.mrf.mxu0
        %v1802 = vadd.f32 0.0, %v1801
        %v1803 = vpop.f32.mrf.mxu0
        %v1804 = vpop.f32.mrf.mxu0
        %v1805 = vadd.f32 0.0, %v1804
        %v1806 = vpop.f32.mrf.mxu0
        %1807 = vmatprep.mubr.bf16.mxu0 %v1579
        %1808 = vmatmul.mubr.bf16.gmra.mxu0 %v1578
        %v1809 = vpop.f32.mrf.mxu0
        %v1810 = vadd.f32 0.0, %v1809
        %v1811 = vpop.f32.mrf.mxu0
        %v1812 = vpop.f32.mrf.mxu0
        %v1813 = vadd.f32 0.0, %v1812
        %v1814 = vpop.f32.mrf.mxu0
        %1815 = vmatprep.mubr.bf16.mxu0 %v1582
        %1816 = vmatmul.mubr.bf16.gmra.mxu0 %v1581
        %v1817 = vpop.f32.mrf.mxu0
        %v1818 = vadd.f32 0.0, %v1817
        %v1819 = vpop.f32.mrf.mxu0
        %v1820 = vpop.f32.mrf.mxu0
        %v1821 = vadd.f32 0.0, %v1820
        %v1822 = vpop.f32.mrf.mxu0
        %1823 = vmatprep.mubr.bf16.mxu0 %v1585
        %1824 = vmatmul.mubr.bf16.gmra.mxu0 %v1584
        %v1825 = vpop.f32.mrf.mxu0
        %v1826 = vadd.f32 0.0, %v1825
        %v1827 = vpop.f32.mrf.mxu0
        %v1828 = vpop.f32.mrf.mxu0
        %v1829 = vadd.f32 0.0, %v1828
        %v1830 = vpop.f32.mrf.mxu0
        %1831 = vmatprep.mubr.bf16.mxu0 %v1588
        %1832 = vmatmul.mubr.bf16.gmra.mxu0 %v1587
        %v1833 = vpop.f32.mrf.mxu0
        %v1834 = vadd.f32 0.0, %v1833
        %v1835 = vpop.f32.mrf.mxu0
        %v1836 = vpop.f32.mrf.mxu0
        %v1837 = vadd.f32 0.0, %v1836
        %v1838 = vpop.f32.mrf.mxu0
        %1839 = vmatprep.mubr.bf16.mxu0 %v1591
        %1840 = vmatmul.mubr.bf16.gmra.mxu0 %v1590
        %v1841 = vpop.f32.mrf.mxu0
        %v1842 = vadd.f32 0.0, %v1841
        %v1843 = vpop.f32.mrf.mxu0
        %v1844 = vpop.f32.mrf.mxu0
        %v1845 = vadd.f32 0.0, %v1844
        %v1846 = vpop.f32.mrf.mxu0
        %1847 = vmatprep.mubr.bf16.mxu0 %v1594
        %1848 = vmatmul.mubr.bf16.gmra.mxu0 %v1593
        %v1849 = vpop.f32.mrf.mxu0
        %v1850 = vadd.f32 0.0, %v1849
        %v1851 = vpop.f32.mrf.mxu0
        %v1852 = vpop.f32.mrf.mxu0
        %v1853 = vadd.f32 0.0, %v1852
        %v1854 = vpop.f32.mrf.mxu0
        %1855 = vmatprep.mubr.bf16.mxu0 %v1597
        %1856 = vmatmul.mubr.bf16.gmra.mxu0 %v1596
        %v1857 = vpop.f32.mrf.mxu0
        %v1858 = vadd.f32 0.0, %v1857
        %v1859 = vpop.f32.mrf.mxu0
        %v1860 = vpop.f32.mrf.mxu0
        %v1861 = vadd.f32 0.0, %v1860
        %v1862 = vpop.f32.mrf.mxu0
        %1863 = vdwg.mxu0
        %1864 = vmatprep.subr.bf16.mxu0 0
        %1865 = vmatpush1.bf16.msra.mxu0 %v1742
        %1866 = vmatprep.subr.bf16.mxu0 0
        %1867 = vmatpush1.bf16.msra.mxu0 %v1741
        %1868 = vmatprep.subr.bf16.mxu0 0
        %1869 = vmatpush1.bf16.msra.mxu0 %v1740
        %1870 = vmatprep.subr.bf16.mxu0 0
        %1871 = vmatpush1.bf16.msra.mxu0 %v1739
        %1872 = vmatprep.subr.bf16.mxu0 0
        %1873 = vmatpush1.bf16.msra.mxu0 %v1738
        %1874 = vmatprep.subr.bf16.mxu0 0
        %1875 = vmatpush1.bf16.msra.mxu0 %v1737
        %1876 = vmatprep.subr.bf16.mxu0 0
        %1877 = vmatpush1.bf16.msra.mxu0 %v1736
        %1878 = vmatprep.subr.bf16.mxu0 0
        %1879 = vmatpush1.bf16.msra.mxu0 %v1735
        %1880 = vmatprep.subr.bf16.mxu0 0
        %1881 = vmatpush2.bf16.msra.mxu0 0
        %1882 = vmatprep.subr.bf16.mxu0 0
        %1883 = vmatpush2.bf16.msra.mxu0 0
        %1884 = vmatprep.subr.bf16.mxu0 0
        %1885 = vmatpush2.bf16.msra.mxu0 0
        %1886 = vmatprep.subr.bf16.mxu0 0
        %1887 = vmatpush2.bf16.msra.mxu0 0
        %1888 = vmatprep.subr.bf16.mxu0 0
        %1889 = vmatpush2.bf16.msra.mxu0 0
        %1890 = vmatprep.subr.bf16.mxu0 0
        %1891 = vmatpush2.bf16.msra.mxu0 0
        %1892 = vmatprep.subr.bf16.mxu0 0
        %1893 = vmatpush2.bf16.msra.mxu0 0
        %1894 = vmatprep.subr.bf16.mxu0 0
        %1895 = vmatpush2.bf16.msra.mxu0 0
        %1896 = vmatprep.mubr.bf16.mxu0 0
        %1897 = vmatmul.mubr.bf16.gmra.mxu0 %v1577
        %v1898 = vpop.f32.mrf.mxu0
        %v1899 = vadd.f32 %v1802, %v1898
        %v1900 = vpop.f32.mrf.mxu0
        %v1901 = vpop.f32.mrf.mxu0
        %v1902 = vadd.f32 %v1805, %v1901
        %v1903 = vpop.f32.mrf.mxu0
        %1904 = vmatprep.mubr.bf16.mxu0 0
        %1905 = vmatmul.mubr.bf16.gmra.mxu0 %v1580
        %v1906 = vpop.f32.mrf.mxu0
        %v1907 = vadd.f32 %v1810, %v1906
        %v1908 = vpop.f32.mrf.mxu0
        %v1909 = vpop.f32.mrf.mxu0
        %v1910 = vadd.f32 %v1813, %v1909
        %v1911 = vpop.f32.mrf.mxu0
        %1912 = vmatprep.mubr.bf16.mxu0 0
        %1913 = vmatmul.mubr.bf16.gmra.mxu0 %v1583
        %v1914 = vpop.f32.mrf.mxu0
        %v1915 = vadd.f32 %v1818, %v1914
        %v1916 = vpop.f32.mrf.mxu0
        %v1917 = vpop.f32.mrf.mxu0
        %v1918 = vadd.f32 %v1821, %v1917
        %v1919 = vpop.f32.mrf.mxu0
        %1920 = vmatprep.mubr.bf16.mxu0 0
        %1921 = vmatmul.mubr.bf16.gmra.mxu0 %v1586
        %v1922 = vpop.f32.mrf.mxu0
        %v1923 = vadd.f32 %v1826, %v1922
        %v1924 = vpop.f32.mrf.mxu0
        %v1925 = vpop.f32.mrf.mxu0
        %v1926 = vadd.f32 %v1829, %v1925
        %v1927 = vpop.f32.mrf.mxu0
        %1928 = vmatprep.mubr.bf16.mxu0 0
        %1929 = vmatmul.mubr.bf16.gmra.mxu0 %v1589
        %v1930 = vpop.f32.mrf.mxu0
        %v1931 = vadd.f32 %v1834, %v1930
        %v1932 = vpop.f32.mrf.mxu0
        %v1933 = vpop.f32.mrf.mxu0
        %v1934 = vadd.f32 %v1837, %v1933
        %v1935 = vpop.f32.mrf.mxu0
        %1936 = vmatprep.mubr.bf16.mxu0 0
        %1937 = vmatmul.mubr.bf16.gmra.mxu0 %v1592
        %v1938 = vpop.f32.mrf.mxu0
        %v1939 = vadd.f32 %v1842, %v1938
        %v1940 = vpop.f32.mrf.mxu0
        %v1941 = vpop.f32.mrf.mxu0
        %v1942 = vadd.f32 %v1845, %v1941
        %v1943 = vpop.f32.mrf.mxu0
        %1944 = vmatprep.mubr.bf16.mxu0 0
        %1945 = vmatmul.mubr.bf16.gmra.mxu0 %v1595
        %v1946 = vpop.f32.mrf.mxu0
        %v1947 = vadd.f32 %v1850, %v1946
        %v1948 = vpop.f32.mrf.mxu0
        %v1949 = vpop.f32.mrf.mxu0
        %v1950 = vadd.f32 %v1853, %v1949
        %v1951 = vpop.f32.mrf.mxu0
        %1952 = vmatprep.mubr.bf16.mxu0 0
        %1953 = vmatmul.mubr.bf16.gmra.mxu0 %v1598
        %v1954 = vpop.f32.mrf.mxu0
        %v1955 = vadd.f32 %v1858, %v1954
        %v1956 = vpop.f32.mrf.mxu0
        %v1957 = vpop.f32.mrf.mxu0
        %v1958 = vadd.f32 %v1861, %v1957
        %v1959 = vpop.f32.mrf.mxu0
        %1960 = vdwg.mxu0
        %v1965 = vunpack.c.l.b16 %v1362
        %v1966 = vunpack.c.h.b16 %v1362
        %v1967 = vunpack.c.l.b16 %v1363
        %v1968 = vunpack.c.l.b16 %v1364
        %v1969 = vunpack.c.h.b16 %v1364
        %v1970 = vunpack.c.l.b16 %v1365
        %v1971 = vpack.c.b16 %v1968, %v1965
        %v1972 = vpack.c.b16 %v1969, %v1966
        %v1973 = vpack.c.b16 %v1970, %v1967
        %v2025 = vunpack.c.l.b16 %v1394
        %v2026 = vunpack.c.l.b16 %v1395
        %v2027 = vunpack.c.l.b16 %v1396
        %v2028 = vunpack.c.l.b16 %v1397
        %v2029 = vunpack.c.l.b16 %v1398
        %v2030 = vunpack.c.l.b16 %v1399
        %v2031 = vunpack.c.l.b16 %v1400
        %v2032 = vunpack.c.l.b16 %v1401
        %v2033 = vunpack.c.l.b16 %v1402
        %v2034 = vunpack.c.l.b16 %v1403
        %v2035 = vunpack.c.l.b16 %v1404
        %v2036 = vunpack.c.l.b16 %v1405
        %v2037 = vunpack.c.l.b16 %v1406
        %v2038 = vunpack.c.l.b16 %v1407
        %v2039 = vunpack.c.l.b16 %v1408
        %v2040 = vunpack.c.l.b16 %v1409
        %v2041 = vunpack.c.l.b16 %v1410
        %v2042 = vunpack.c.l.b16 %v1411
        %v2043 = vunpack.c.l.b16 %v1412
        %v2044 = vunpack.c.l.b16 %v1413
        %v2045 = vunpack.c.l.b16 %v1414
        %v2046 = vunpack.c.l.b16 %v1415
        %v2047 = vunpack.c.l.b16 %v1416
        %v2048 = vunpack.c.l.b16 %v1417
        %v2049 = vunpack.c.l.b16 %v1418
        %v2050 = vunpack.c.l.b16 %v1419
        %v2051 = vunpack.c.l.b16 %v1420
        %v2052 = vunpack.c.l.b16 %v1421
        %v2053 = vunpack.c.l.b16 %v1422
        %v2054 = vunpack.c.l.b16 %v1423
        %v2055 = vunpack.c.l.b16 %v1424
        %v2056 = vunpack.c.l.b16 %v1425
        %v2057 = vunpack.c.l.b16 %v1426
        %v2058 = vunpack.c.l.b16 %v1427
        %v2059 = vunpack.c.l.b16 %v1428
        %v2060 = vunpack.c.l.b16 %v1429
        %v2061 = vunpack.c.l.b16 %v1430
        %v2062 = vunpack.c.l.b16 %v1431
        %v2063 = vunpack.c.l.b16 %v1432
        %v2064 = vunpack.c.l.b16 %v1433
        %v2065 = vunpack.c.l.b16 %v1434
        %v2066 = vunpack.c.l.b16 %v1435
        %v2067 = vunpack.c.l.b16 %v1436
        %v2068 = vunpack.c.l.b16 %v1437
        %v2069 = vunpack.c.l.b16 %v1438
        %v2070 = vunpack.c.l.b16 %v1439
        %v2071 = vunpack.c.l.b16 %v1440
        %v2072 = vunpack.c.l.b16 %v1441
        %v2073 = vpack.c.b16 %v2026, %v2025
        %v2074 = vpack.c.b16 %v2028, %v2027
        %v2075 = vpack.c.b16 %v2030, %v2029
        %v2076 = vpack.c.b16 %v2032, %v2031
        %v2077 = vpack.c.b16 %v2034, %v2033
        %v2078 = vpack.c.b16 %v2036, %v2035
        %v2079 = vpack.c.b16 %v2038, %v2037
        %v2080 = vpack.c.b16 %v2040, %v2039
        %v2081 = vpack.c.b16 %v2042, %v2041
        %v2082 = vpack.c.b16 %v2044, %v2043
        %v2083 = vpack.c.b16 %v2046, %v2045
        %v2084 = vpack.c.b16 %v2048, %v2047
        %v2085 = vpack.c.b16 %v2050, %v2049
        %v2086 = vpack.c.b16 %v2052, %v2051
        %v2087 = vpack.c.b16 %v2054, %v2053
        %v2088 = vpack.c.b16 %v2056, %v2055
        %v2089 = vpack.c.b16 %v2058, %v2057
        %v2090 = vpack.c.b16 %v2060, %v2059
        %v2091 = vpack.c.b16 %v2062, %v2061
        %v2092 = vpack.c.b16 %v2064, %v2063
        %v2093 = vpack.c.b16 %v2066, %v2065
        %v2094 = vpack.c.b16 %v2068, %v2067
        %v2095 = vpack.c.b16 %v2070, %v2069
        %v2096 = vpack.c.b16 %v2072, %v2071
        %2121 = vmatprep.subr.bf16.mxu0 0
        %2122 = vmatpush1.bf16.msra.mxu0 %v2080
        %2123 = vmatprep.subr.bf16.mxu0 0
        %2124 = vmatpush1.bf16.msra.mxu0 %v2079
        %2125 = vmatprep.subr.bf16.mxu0 0
        %2126 = vmatpush1.bf16.msra.mxu0 %v2078
        %2127 = vmatprep.subr.bf16.mxu0 0
        %2128 = vmatpush1.bf16.msra.mxu0 %v2077
        %2129 = vmatprep.subr.bf16.mxu0 0
        %2130 = vmatpush1.bf16.msra.mxu0 %v2076
        %2131 = vmatprep.subr.bf16.mxu0 0
        %2132 = vmatpush1.bf16.msra.mxu0 %v2075
        %2133 = vmatprep.subr.bf16.mxu0 0
        %2134 = vmatpush1.bf16.msra.mxu0 %v2074
        %2135 = vmatprep.subr.bf16.mxu0 0
        %2136 = vmatpush1.bf16.msra.mxu0 %v2073
        %2137 = vmatprep.subr.bf16.mxu0 0
        %2138 = vmatpush2.bf16.msra.mxu0 %v2088
        %2139 = vmatprep.subr.bf16.mxu0 0
        %2140 = vmatpush2.bf16.msra.mxu0 %v2087
        %2141 = vmatprep.subr.bf16.mxu0 0
        %2142 = vmatpush2.bf16.msra.mxu0 %v2086
        %2143 = vmatprep.subr.bf16.mxu0 0
        %2144 = vmatpush2.bf16.msra.mxu0 %v2085
        %2145 = vmatprep.subr.bf16.mxu0 0
        %2146 = vmatpush2.bf16.msra.mxu0 %v2084
        %2147 = vmatprep.subr.bf16.mxu0 0
        %2148 = vmatpush2.bf16.msra.mxu0 %v2083
        %2149 = vmatprep.subr.bf16.mxu0 0
        %2150 = vmatpush2.bf16.msra.mxu0 %v2082
        %2151 = vmatprep.subr.bf16.mxu0 0
        %2152 = vmatpush2.bf16.msra.mxu0 %v2081
        %2153 = vmatprep.mubr.bf16.mxu0 %v1972
        %2154 = vmatmul.mubr.bf16.gmra.mxu0 %v1971
        %v2155 = vpop.f32.mrf.mxu0
        %v2156 = vadd.f32 %v1899, %v2155
        %v2157 = vpop.f32.mrf.mxu0
        %v2158 = vpop.f32.mrf.mxu0
        %v2159 = vadd.f32 %v1902, %v2158
        %v2160 = vpop.f32.mrf.mxu0
        %2161 = vmatprep.mubr.bf16.mxu0 %v1576
        %2162 = vmatmul.mubr.bf16.gmra.mxu0 %v1575
        %v2163 = vpop.f32.mrf.mxu0
        %v2164 = vadd.f32 %v1907, %v2163
        %v2165 = vpop.f32.mrf.mxu0
        %v2166 = vpop.f32.mrf.mxu0
        %v2167 = vadd.f32 %v1910, %v2166
        %v2168 = vpop.f32.mrf.mxu0
        %2169 = vmatprep.mubr.bf16.mxu0 %v1579
        %2170 = vmatmul.mubr.bf16.gmra.mxu0 %v1578
        %v2171 = vpop.f32.mrf.mxu0
        %v2172 = vadd.f32 %v1915, %v2171
        %v2173 = vpop.f32.mrf.mxu0
        %v2174 = vpop.f32.mrf.mxu0
        %v2175 = vadd.f32 %v1918, %v2174
        %v2176 = vpop.f32.mrf.mxu0
        %2177 = vmatprep.mubr.bf16.mxu0 %v1582
        %2178 = vmatmul.mubr.bf16.gmra.mxu0 %v1581
        %v2179 = vpop.f32.mrf.mxu0
        %v2180 = vadd.f32 %v1923, %v2179
        %v2181 = vpop.f32.mrf.mxu0
        %v2182 = vpop.f32.mrf.mxu0
        %v2183 = vadd.f32 %v1926, %v2182
        %v2184 = vpop.f32.mrf.mxu0
        %2185 = vmatprep.mubr.bf16.mxu0 %v1585
        %2186 = vmatmul.mubr.bf16.gmra.mxu0 %v1584
        %v2187 = vpop.f32.mrf.mxu0
        %v2188 = vadd.f32 %v1931, %v2187
        %v2189 = vpop.f32.mrf.mxu0
        %v2190 = vpop.f32.mrf.mxu0
        %v2191 = vadd.f32 %v1934, %v2190
        %v2192 = vpop.f32.mrf.mxu0
        %2193 = vmatprep.mubr.bf16.mxu0 %v1588
        %2194 = vmatmul.mubr.bf16.gmra.mxu0 %v1587
        %v2195 = vpop.f32.mrf.mxu0
        %v2196 = vadd.f32 %v1939, %v2195
        %v2197 = vpop.f32.mrf.mxu0
        %v2198 = vpop.f32.mrf.mxu0
        %v2199 = vadd.f32 %v1942, %v2198
        %v2200 = vpop.f32.mrf.mxu0
        %2201 = vmatprep.mubr.bf16.mxu0 %v1591
        %2202 = vmatmul.mubr.bf16.gmra.mxu0 %v1590
        %v2203 = vpop.f32.mrf.mxu0
        %v2204 = vadd.f32 %v1947, %v2203
        %v2205 = vpop.f32.mrf.mxu0
        %v2206 = vpop.f32.mrf.mxu0
        %v2207 = vadd.f32 %v1950, %v2206
        %v2208 = vpop.f32.mrf.mxu0
        %2209 = vmatprep.mubr.bf16.mxu0 %v1594
        %2210 = vmatmul.mubr.bf16.gmra.mxu0 %v1593
        %v2211 = vpop.f32.mrf.mxu0
        %v2212 = vadd.f32 %v1955, %v2211
        %v2213 = vpop.f32.mrf.mxu0
        %v2214 = vpop.f32.mrf.mxu0
        %v2215 = vadd.f32 %v1958, %v2214
        %v2216 = vpop.f32.mrf.mxu0
        %2217 = vdwg.mxu0
        %2218 = vmatprep.subr.bf16.mxu0 0
        %2219 = vmatpush1.bf16.msra.mxu0 %v2096
        %2220 = vmatprep.subr.bf16.mxu0 0
        %2221 = vmatpush1.bf16.msra.mxu0 %v2095
        %2222 = vmatprep.subr.bf16.mxu0 0
        %2223 = vmatpush1.bf16.msra.mxu0 %v2094
        %2224 = vmatprep.subr.bf16.mxu0 0
        %2225 = vmatpush1.bf16.msra.mxu0 %v2093
        %2226 = vmatprep.subr.bf16.mxu0 0
        %2227 = vmatpush1.bf16.msra.mxu0 %v2092
        %2228 = vmatprep.subr.bf16.mxu0 0
        %2229 = vmatpush1.bf16.msra.mxu0 %v2091
        %2230 = vmatprep.subr.bf16.mxu0 0
        %2231 = vmatpush1.bf16.msra.mxu0 %v2090
        %2232 = vmatprep.subr.bf16.mxu0 0
        %2233 = vmatpush1.bf16.msra.mxu0 %v2089
        %2234 = vmatprep.subr.bf16.mxu0 0
        %2235 = vmatpush2.bf16.msra.mxu0 0
        %2236 = vmatprep.subr.bf16.mxu0 0
        %2237 = vmatpush2.bf16.msra.mxu0 0
        %2238 = vmatprep.subr.bf16.mxu0 0
        %2239 = vmatpush2.bf16.msra.mxu0 0
        %2240 = vmatprep.subr.bf16.mxu0 0
        %2241 = vmatpush2.bf16.msra.mxu0 0
        %2242 = vmatprep.subr.bf16.mxu0 0
        %2243 = vmatpush2.bf16.msra.mxu0 0
        %2244 = vmatprep.subr.bf16.mxu0 0
        %2245 = vmatpush2.bf16.msra.mxu0 0
        %2246 = vmatprep.subr.bf16.mxu0 0
        %2247 = vmatpush2.bf16.msra.mxu0 0
        %2248 = vmatprep.subr.bf16.mxu0 0
        %2249 = vmatpush2.bf16.msra.mxu0 0
        %2250 = vmatprep.mubr.bf16.mxu0 0
        %2251 = vmatmul.mubr.bf16.gmra.mxu0 %v1973
        %v2252 = vpop.f32.mrf.mxu0
        %v2253 = vadd.f32 %v2156, %v2252
        %v2254 = vpop.f32.mrf.mxu0
        %v2255 = vpop.f32.mrf.mxu0
        %v2256 = vadd.f32 %v2159, %v2255
        %v2257 = vpop.f32.mrf.mxu0
        %2258 = vmatprep.mubr.bf16.mxu0 0
        %2259 = vmatmul.mubr.bf16.gmra.mxu0 %v1577
        %v2260 = vpop.f32.mrf.mxu0
        %v2261 = vadd.f32 %v2164, %v2260
        %v2262 = vpop.f32.mrf.mxu0
        %v2263 = vpop.f32.mrf.mxu0
        %v2264 = vadd.f32 %v2167, %v2263
        %v2265 = vpop.f32.mrf.mxu0
        %2266 = vmatprep.mubr.bf16.mxu0 0
        %2267 = vmatmul.mubr.bf16.gmra.mxu0 %v1580
        %v2268 = vpop.f32.mrf.mxu0
        %v2269 = vadd.f32 %v2172, %v2268
        %v2270 = vpop.f32.mrf.mxu0
        %v2271 = vpop.f32.mrf.mxu0
        %v2272 = vadd.f32 %v2175, %v2271
        %v2273 = vpop.f32.mrf.mxu0
        %2274 = vmatprep.mubr.bf16.mxu0 0
        %2275 = vmatmul.mubr.bf16.gmra.mxu0 %v1583
        %v2276 = vpop.f32.mrf.mxu0
        %v2277 = vadd.f32 %v2180, %v2276
        %v2278 = vpop.f32.mrf.mxu0
        %v2279 = vpop.f32.mrf.mxu0
        %v2280 = vadd.f32 %v2183, %v2279
        %v2281 = vpop.f32.mrf.mxu0
        %2282 = vmatprep.mubr.bf16.mxu0 0
        %2283 = vmatmul.mubr.bf16.gmra.mxu0 %v1586
        %v2284 = vpop.f32.mrf.mxu0
        %v2285 = vadd.f32 %v2188, %v2284
        %v2286 = vpop.f32.mrf.mxu0
        %v2287 = vpop.f32.mrf.mxu0
        %v2288 = vadd.f32 %v2191, %v2287
        %v2289 = vpop.f32.mrf.mxu0
        %2290 = vmatprep.mubr.bf16.mxu0 0
        %2291 = vmatmul.mubr.bf16.gmra.mxu0 %v1589
        %v2292 = vpop.f32.mrf.mxu0
        %v2293 = vadd.f32 %v2196, %v2292
        %v2294 = vpop.f32.mrf.mxu0
        %v2295 = vpop.f32.mrf.mxu0
        %v2296 = vadd.f32 %v2199, %v2295
        %v2297 = vpop.f32.mrf.mxu0
        %2298 = vmatprep.mubr.bf16.mxu0 0
        %2299 = vmatmul.mubr.bf16.gmra.mxu0 %v1592
        %v2300 = vpop.f32.mrf.mxu0
        %v2301 = vadd.f32 %v2204, %v2300
        %v2302 = vpop.f32.mrf.mxu0
        %v2303 = vpop.f32.mrf.mxu0
        %v2304 = vadd.f32 %v2207, %v2303
        %v2305 = vpop.f32.mrf.mxu0
        %2306 = vmatprep.mubr.bf16.mxu0 0
        %2307 = vmatmul.mubr.bf16.gmra.mxu0 %v1595
        %v2308 = vpop.f32.mrf.mxu0
        %v2309 = vadd.f32 %v2212, %v2308
        %v2310 = vpop.f32.mrf.mxu0
        %v2311 = vpop.f32.mrf.mxu0
        %v2312 = vadd.f32 %v2215, %v2311
        %v2313 = vpop.f32.mrf.mxu0
        %2314 = vdwg.mxu0
        %v2315 = vld [vmem:[#allocation3 + $0x30] sm:$0xff]
        %v2316 = vld [vmem:[#allocation3 + $0x38] sm:$0xf]
        %v2317 = vld [vmem:[#allocation3 + $0x3c] sm:$0xff]
        %v2318 = vld [vmem:[#allocation3 + $0x44] sm:$0xf]
        %v2319 = vld [vmem:[#allocation3 + $0x48] sm:$0xff]
        %v2320 = vld [vmem:[#allocation3 + $0x50] sm:$0xf]
        %v2321 = vld [vmem:[#allocation3 + $0x54] sm:$0xff]
        %v2322 = vld [vmem:[#allocation3 + $0x5c] sm:$0xf]
        %v2323 = vld [vmem:[#allocation3 + $0x60] sm:$0xff]
        %v2324 = vld [vmem:[#allocation3 + $0x68] sm:$0xf]
        %v2325 = vld [vmem:[#allocation3 + $0x6c] sm:$0xff]
        %v2326 = vld [vmem:[#allocation3 + $0x74] sm:$0xf]
        %v2327 = vld [vmem:[#allocation3 + $0x78] sm:$0xff]
        %v2328 = vld [vmem:[#allocation3 + $0x80] sm:$0xf]
        %v2329 = vld [vmem:[#allocation3 + $0x84] sm:$0xff]
        %v2330 = vld [vmem:[#allocation3 + $0x8c] sm:$0xf]
        %v2331 = vld [vmem:[#allocation3 + $0x90] sm:$0xff]
        %v2332 = vld [vmem:[#allocation3 + $0x98] sm:$0xf]
        %v2333 = vld [vmem:[#allocation3 + $0x9c] sm:$0xff]
        %v2334 = vld [vmem:[#allocation3 + $0xa4] sm:$0xf]
        %v2335 = vld [vmem:[#allocation3 + $0xa8] sm:$0xff]
        %v2336 = vld [vmem:[#allocation3 + $0xb0] sm:$0xf]
        %v2337 = vld [vmem:[#allocation3 + $0xb4] sm:$0xff]
        %v2338 = vld [vmem:[#allocation3 + $0xbc] sm:$0xf]
        %v2339 = vld [vmem:[#allocation3 + $0xc0] sm:$0xff]
        %v2340 = vld [vmem:[#allocation3 + $0xc8] sm:$0xf]
        %v2341 = vld [vmem:[#allocation3 + $0xcc] sm:$0xff]
        %v2342 = vld [vmem:[#allocation3 + $0xd4] sm:$0xf]
        %v2343 = vld [vmem:[#allocation3 + $0xd8] sm:$0xff]
        %v2344 = vld [vmem:[#allocation3 + $0xe0] sm:$0xf]
        %v2345 = vld [vmem:[#allocation3 + $0xe4] sm:$0xff]
        %v2346 = vld [vmem:[#allocation3 + $0xec] sm:$0xf]
        %s2347 = scalar_lea.vmem [#allocation10], 384
        %v2348 = vld [vmem:[%s2347] sm:$0xf]
        %v2349 = vld [vmem:[%s2347 + $0x4] sm:$0xf]
        %v2350 = vld [vmem:[%s2347 + $0x8] sm:$0xf]
        %v2351 = vld [vmem:[%s2347 + $0xc] sm:$0xf]
        %v2352 = vld [vmem:[%s2347 + $0x10] sm:$0xf]
        %v2353 = vld [vmem:[%s2347 + $0x14] sm:$0xf]
        %v2354 = vld [vmem:[%s2347 + $0x18] sm:$0xf]
        %v2355 = vld [vmem:[%s2347 + $0x1c] sm:$0xf]
        %v2356 = vld [vmem:[%s2347 + $0x20] sm:$0xf]
        %v2357 = vld [vmem:[%s2347 + $0x24] sm:$0xf]
        %v2358 = vld [vmem:[%s2347 + $0x28] sm:$0xf]
        %v2359 = vld [vmem:[%s2347 + $0x2c] sm:$0xf]
        %v2360 = vld [vmem:[%s2347 + $0x30] sm:$0xf]
        %v2361 = vld [vmem:[%s2347 + $0x34] sm:$0xf]
        %v2362 = vld [vmem:[%s2347 + $0x38] sm:$0xf]
        %v2363 = vld [vmem:[%s2347 + $0x3c] sm:$0xf]
        %v2364 = vld [vmem:[%s2347 + $0x40] sm:$0xf]
        %v2365 = vld [vmem:[%s2347 + $0x44] sm:$0xf]
        %v2366 = vld [vmem:[%s2347 + $0x48] sm:$0xf]
        %v2367 = vld [vmem:[%s2347 + $0x4c] sm:$0xf]
        %v2368 = vld [vmem:[%s2347 + $0x50] sm:$0xf]
        %v2369 = vld [vmem:[%s2347 + $0x54] sm:$0xf]
        %v2370 = vld [vmem:[%s2347 + $0x58] sm:$0xf]
        %v2371 = vld [vmem:[%s2347 + $0x5c] sm:$0xf]
        %v2372 = vld [vmem:[%s2347 + $0x60] sm:$0xf]
        %v2373 = vld [vmem:[%s2347 + $0x64] sm:$0xf]
        %v2374 = vld [vmem:[%s2347 + $0x68] sm:$0xf]
        %v2375 = vld [vmem:[%s2347 + $0x6c] sm:$0xf]
        %v2376 = vld [vmem:[%s2347 + $0x70] sm:$0xf]
        %v2377 = vld [vmem:[%s2347 + $0x74] sm:$0xf]
        %v2378 = vld [vmem:[%s2347 + $0x78] sm:$0xf]
        %v2379 = vld [vmem:[%s2347 + $0x7c] sm:$0xf]
        %v2380 = vld [vmem:[%s2347 + $0x80] sm:$0xf]
        %v2381 = vld [vmem:[%s2347 + $0x84] sm:$0xf]
        %v2382 = vld [vmem:[%s2347 + $0x88] sm:$0xf]
        %v2383 = vld [vmem:[%s2347 + $0x8c] sm:$0xf]
        %v2384 = vld [vmem:[%s2347 + $0x90] sm:$0xf]
        %v2385 = vld [vmem:[%s2347 + $0x94] sm:$0xf]
        %v2386 = vld [vmem:[%s2347 + $0x98] sm:$0xf]
        %v2387 = vld [vmem:[%s2347 + $0x9c] sm:$0xf]
        %v2388 = vld [vmem:[%s2347 + $0xa0] sm:$0xf]
        %v2389 = vld [vmem:[%s2347 + $0xa4] sm:$0xf]
        %v2390 = vld [vmem:[%s2347 + $0xa8] sm:$0xf]
        %v2391 = vld [vmem:[%s2347 + $0xac] sm:$0xf]
        %v2392 = vld [vmem:[%s2347 + $0xb0] sm:$0xf]
        %v2393 = vld [vmem:[%s2347 + $0xb4] sm:$0xf]
        %v2394 = vld [vmem:[%s2347 + $0xb8] sm:$0xf]
        %v2395 = vld [vmem:[%s2347 + $0xbc] sm:$0xf]
        %v2428 = vunpack.c.l.b16 %v2315
        %v2429 = vunpack.c.h.b16 %v2315
        %v2430 = vunpack.c.l.b16 %v2316
        %v2431 = vunpack.c.l.b16 %v2317
        %v2432 = vunpack.c.h.b16 %v2317
        %v2433 = vunpack.c.l.b16 %v2318
        %v2434 = vunpack.c.l.b16 %v2319
        %v2435 = vunpack.c.h.b16 %v2319
        %v2436 = vunpack.c.l.b16 %v2320
        %v2437 = vunpack.c.l.b16 %v2321
        %v2438 = vunpack.c.h.b16 %v2321
        %v2439 = vunpack.c.l.b16 %v2322
        %v2440 = vunpack.c.l.b16 %v2323
        %v2441 = vunpack.c.h.b16 %v2323
        %v2442 = vunpack.c.l.b16 %v2324
        %v2443 = vunpack.c.l.b16 %v2325
        %v2444 = vunpack.c.h.b16 %v2325
        %v2445 = vunpack.c.l.b16 %v2326
        %v2446 = vunpack.c.l.b16 %v2327
        %v2447 = vunpack.c.h.b16 %v2327
        %v2448 = vunpack.c.l.b16 %v2328
        %v2449 = vunpack.c.l.b16 %v2329
        %v2450 = vunpack.c.h.b16 %v2329
        %v2451 = vunpack.c.l.b16 %v2330
        %v2452 = vunpack.c.l.b16 %v2331
        %v2453 = vunpack.c.h.b16 %v2331
        %v2454 = vunpack.c.l.b16 %v2332
        %v2455 = vunpack.c.l.b16 %v2333
        %v2456 = vunpack.c.h.b16 %v2333
        %v2457 = vunpack.c.l.b16 %v2334
        %v2458 = vunpack.c.l.b16 %v2335
        %v2459 = vunpack.c.h.b16 %v2335
        %v2460 = vunpack.c.l.b16 %v2336
        %v2461 = vunpack.c.l.b16 %v2337
        %v2462 = vunpack.c.h.b16 %v2337
        %v2463 = vunpack.c.l.b16 %v2338
        %v2464 = vunpack.c.l.b16 %v2339
        %v2465 = vunpack.c.h.b16 %v2339
        %v2466 = vunpack.c.l.b16 %v2340
        %v2467 = vunpack.c.l.b16 %v2341
        %v2468 = vunpack.c.h.b16 %v2341
        %v2469 = vunpack.c.l.b16 %v2342
        %v2470 = vunpack.c.l.b16 %v2343
        %v2471 = vunpack.c.h.b16 %v2343
        %v2472 = vunpack.c.l.b16 %v2344
        %v2473 = vunpack.c.l.b16 %v2345
        %v2474 = vunpack.c.h.b16 %v2345
        %v2475 = vunpack.c.l.b16 %v2346
        %v2476 = vpack.c.b16 %v2431, %v2428
        %v2477 = vpack.c.b16 %v2432, %v2429
        %v2478 = vpack.c.b16 %v2433, %v2430
        %v2479 = vpack.c.b16 %v2437, %v2434
        %v2480 = vpack.c.b16 %v2438, %v2435
        %v2481 = vpack.c.b16 %v2439, %v2436
        %v2482 = vpack.c.b16 %v2443, %v2440
        %v2483 = vpack.c.b16 %v2444, %v2441
        %v2484 = vpack.c.b16 %v2445, %v2442
        %v2485 = vpack.c.b16 %v2449, %v2446
        %v2486 = vpack.c.b16 %v2450, %v2447
        %v2487 = vpack.c.b16 %v2451, %v2448
        %v2488 = vpack.c.b16 %v2455, %v2452
        %v2489 = vpack.c.b16 %v2456, %v2453
        %v2490 = vpack.c.b16 %v2457, %v2454
        %v2491 = vpack.c.b16 %v2461, %v2458
        %v2492 = vpack.c.b16 %v2462, %v2459
        %v2493 = vpack.c.b16 %v2463, %v2460
        %v2494 = vpack.c.b16 %v2467, %v2464
        %v2495 = vpack.c.b16 %v2468, %v2465
        %v2496 = vpack.c.b16 %v2469, %v2466
        %v2497 = vpack.c.b16 %v2473, %v2470
        %v2498 = vpack.c.b16 %v2474, %v2471
        %v2499 = vpack.c.b16 %v2475, %v2472
        %v2572 = vunpack.c.l.b16 %v2348
        %v2573 = vunpack.c.l.b16 %v2349
        %v2574 = vunpack.c.l.b16 %v2350
        %v2575 = vunpack.c.l.b16 %v2351
        %v2576 = vunpack.c.l.b16 %v2352
        %v2577 = vunpack.c.l.b16 %v2353
        %v2578 = vunpack.c.l.b16 %v2354
        %v2579 = vunpack.c.l.b16 %v2355
        %v2580 = vunpack.c.l.b16 %v2356
        %v2581 = vunpack.c.l.b16 %v2357
        %v2582 = vunpack.c.l.b16 %v2358
        %v2583 = vunpack.c.l.b16 %v2359
        %v2584 = vunpack.c.l.b16 %v2360
        %v2585 = vunpack.c.l.b16 %v2361
        %v2586 = vunpack.c.l.b16 %v2362
        %v2587 = vunpack.c.l.b16 %v2363
        %v2588 = vunpack.c.l.b16 %v2364
        %v2589 = vunpack.c.l.b16 %v2365
        %v2590 = vunpack.c.l.b16 %v2366
        %v2591 = vunpack.c.l.b16 %v2367
        %v2592 = vunpack.c.l.b16 %v2368
        %v2593 = vunpack.c.l.b16 %v2369
        %v2594 = vunpack.c.l.b16 %v2370
        %v2595 = vunpack.c.l.b16 %v2371
        %v2596 = vunpack.c.l.b16 %v2372
        %v2597 = vunpack.c.l.b16 %v2373
        %v2598 = vunpack.c.l.b16 %v2374
        %v2599 = vunpack.c.l.b16 %v2375
        %v2600 = vunpack.c.l.b16 %v2376
        %v2601 = vunpack.c.l.b16 %v2377
        %v2602 = vunpack.c.l.b16 %v2378
        %v2603 = vunpack.c.l.b16 %v2379
        %v2604 = vunpack.c.l.b16 %v2380
        %v2605 = vunpack.c.l.b16 %v2381
        %v2606 = vunpack.c.l.b16 %v2382
        %v2607 = vunpack.c.l.b16 %v2383
        %v2608 = vunpack.c.l.b16 %v2384
        %v2609 = vunpack.c.l.b16 %v2385
        %v2610 = vunpack.c.l.b16 %v2386
        %v2611 = vunpack.c.l.b16 %v2387
        %v2612 = vunpack.c.l.b16 %v2388
        %v2613 = vunpack.c.l.b16 %v2389
        %v2614 = vunpack.c.l.b16 %v2390
        %v2615 = vunpack.c.l.b16 %v2391
        %v2616 = vunpack.c.l.b16 %v2392
        %v2617 = vunpack.c.l.b16 %v2393
        %v2618 = vunpack.c.l.b16 %v2394
        %v2619 = vunpack.c.l.b16 %v2395
        %v2620 = vpack.c.b16 %v2573, %v2572
        %v2621 = vpack.c.b16 %v2575, %v2574
        %v2622 = vpack.c.b16 %v2577, %v2576
        %v2623 = vpack.c.b16 %v2579, %v2578
        %v2624 = vpack.c.b16 %v2581, %v2580
        %v2625 = vpack.c.b16 %v2583, %v2582
        %v2626 = vpack.c.b16 %v2585, %v2584
        %v2627 = vpack.c.b16 %v2587, %v2586
        %v2628 = vpack.c.b16 %v2589, %v2588
        %v2629 = vpack.c.b16 %v2591, %v2590
        %v2630 = vpack.c.b16 %v2593, %v2592
        %v2631 = vpack.c.b16 %v2595, %v2594
        %v2632 = vpack.c.b16 %v2597, %v2596
        %v2633 = vpack.c.b16 %v2599, %v2598
        %v2634 = vpack.c.b16 %v2601, %v2600
        %v2635 = vpack.c.b16 %v2603, %v2602
        %v2636 = vpack.c.b16 %v2605, %v2604
        %v2637 = vpack.c.b16 %v2607, %v2606
        %v2638 = vpack.c.b16 %v2609, %v2608
        %v2639 = vpack.c.b16 %v2611, %v2610
        %v2640 = vpack.c.b16 %v2613, %v2612
        %v2641 = vpack.c.b16 %v2615, %v2614
        %v2642 = vpack.c.b16 %v2617, %v2616
        %v2643 = vpack.c.b16 %v2619, %v2618
        %2668 = vmatprep.subr.bf16.mxu0 0
        %2669 = vmatpush1.bf16.msra.mxu0 %v2627
        %2670 = vmatprep.subr.bf16.mxu0 0
        %2671 = vmatpush1.bf16.msra.mxu0 %v2626
        %2672 = vmatprep.subr.bf16.mxu0 0
        %2673 = vmatpush1.bf16.msra.mxu0 %v2625
        %2674 = vmatprep.subr.bf16.mxu0 0
        %2675 = vmatpush1.bf16.msra.mxu0 %v2624
        %2676 = vmatprep.subr.bf16.mxu0 0
        %2677 = vmatpush1.bf16.msra.mxu0 %v2623
        %2678 = vmatprep.subr.bf16.mxu0 0
        %2679 = vmatpush1.bf16.msra.mxu0 %v2622
        %2680 = vmatprep.subr.bf16.mxu0 0
        %2681 = vmatpush1.bf16.msra.mxu0 %v2621
        %2682 = vmatprep.subr.bf16.mxu0 0
        %2683 = vmatpush1.bf16.msra.mxu0 %v2620
        %2684 = vmatprep.subr.bf16.mxu0 0
        %2685 = vmatpush2.bf16.msra.mxu0 %v2635
        %2686 = vmatprep.subr.bf16.mxu0 0
        %2687 = vmatpush2.bf16.msra.mxu0 %v2634
        %2688 = vmatprep.subr.bf16.mxu0 0
        %2689 = vmatpush2.bf16.msra.mxu0 %v2633
        %2690 = vmatprep.subr.bf16.mxu0 0
        %2691 = vmatpush2.bf16.msra.mxu0 %v2632
        %2692 = vmatprep.subr.bf16.mxu0 0
        %2693 = vmatpush2.bf16.msra.mxu0 %v2631
        %2694 = vmatprep.subr.bf16.mxu0 0
        %2695 = vmatpush2.bf16.msra.mxu0 %v2630
        %2696 = vmatprep.subr.bf16.mxu0 0
        %2697 = vmatpush2.bf16.msra.mxu0 %v2629
        %2698 = vmatprep.subr.bf16.mxu0 0
        %2699 = vmatpush2.bf16.msra.mxu0 %v2628
        %2700 = vmatprep.mubr.bf16.mxu0 %v2477
        %2701 = vmatmul.mubr.bf16.gmra.mxu0 %v2476
        %v2702 = vpop.f32.mrf.mxu0
        %v2703 = vadd.f32 0.0, %v2702
        %v2704 = vpop.f32.mrf.mxu0
        %v2705 = vpop.f32.mrf.mxu0
        %v2706 = vadd.f32 0.0, %v2705
        %v2707 = vpop.f32.mrf.mxu0
        %2708 = vmatprep.mubr.bf16.mxu0 %v2480
        %2709 = vmatmul.mubr.bf16.gmra.mxu0 %v2479
        %v2710 = vpop.f32.mrf.mxu0
        %v2711 = vadd.f32 0.0, %v2710
        %v2712 = vpop.f32.mrf.mxu0
        %v2713 = vpop.f32.mrf.mxu0
        %v2714 = vadd.f32 0.0, %v2713
        %v2715 = vpop.f32.mrf.mxu0
        %2716 = vmatprep.mubr.bf16.mxu0 %v2483
        %2717 = vmatmul.mubr.bf16.gmra.mxu0 %v2482
        %v2718 = vpop.f32.mrf.mxu0
        %v2719 = vadd.f32 0.0, %v2718
        %v2720 = vpop.f32.mrf.mxu0
        %v2721 = vpop.f32.mrf.mxu0
        %v2722 = vadd.f32 0.0, %v2721
        %v2723 = vpop.f32.mrf.mxu0
        %2724 = vmatprep.mubr.bf16.mxu0 %v2486
        %2725 = vmatmul.mubr.bf16.gmra.mxu0 %v2485
        %v2726 = vpop.f32.mrf.mxu0
        %v2727 = vadd.f32 0.0, %v2726
        %v2728 = vpop.f32.mrf.mxu0
        %v2729 = vpop.f32.mrf.mxu0
        %v2730 = vadd.f32 0.0, %v2729
        %v2731 = vpop.f32.mrf.mxu0
        %2732 = vmatprep.mubr.bf16.mxu0 %v2489
        %2733 = vmatmul.mubr.bf16.gmra.mxu0 %v2488
        %v2734 = vpop.f32.mrf.mxu0
        %v2735 = vadd.f32 0.0, %v2734
        %v2736 = vpop.f32.mrf.mxu0
        %v2737 = vpop.f32.mrf.mxu0
        %v2738 = vadd.f32 0.0, %v2737
        %v2739 = vpop.f32.mrf.mxu0
        %2740 = vmatprep.mubr.bf16.mxu0 %v2492
        %2741 = vmatmul.mubr.bf16.gmra.mxu0 %v2491
        %v2742 = vpop.f32.mrf.mxu0
        %v2743 = vadd.f32 0.0, %v2742
        %v2744 = vpop.f32.mrf.mxu0
        %v2745 = vpop.f32.mrf.mxu0
        %v2746 = vadd.f32 0.0, %v2745
        %v2747 = vpop.f32.mrf.mxu0
        %2748 = vmatprep.mubr.bf16.mxu0 %v2495
        %2749 = vmatmul.mubr.bf16.gmra.mxu0 %v2494
        %v2750 = vpop.f32.mrf.mxu0
        %v2751 = vadd.f32 0.0, %v2750
        %v2752 = vpop.f32.mrf.mxu0
        %v2753 = vpop.f32.mrf.mxu0
        %v2754 = vadd.f32 0.0, %v2753
        %v2755 = vpop.f32.mrf.mxu0
        %2756 = vmatprep.mubr.bf16.mxu0 %v2498
        %2757 = vmatmul.mubr.bf16.gmra.mxu0 %v2497
        %v2758 = vpop.f32.mrf.mxu0
        %v2759 = vadd.f32 0.0, %v2758
        %v2760 = vpop.f32.mrf.mxu0
        %v2761 = vpop.f32.mrf.mxu0
        %v2762 = vadd.f32 0.0, %v2761
        %v2763 = vpop.f32.mrf.mxu0
        %2764 = vdwg.mxu0
        %2765 = vmatprep.subr.bf16.mxu0 0
        %2766 = vmatpush1.bf16.msra.mxu0 %v2643
        %2767 = vmatprep.subr.bf16.mxu0 0
        %2768 = vmatpush1.bf16.msra.mxu0 %v2642
        %2769 = vmatprep.subr.bf16.mxu0 0
        %2770 = vmatpush1.bf16.msra.mxu0 %v2641
        %2771 = vmatprep.subr.bf16.mxu0 0
        %2772 = vmatpush1.bf16.msra.mxu0 %v2640
        %2773 = vmatprep.subr.bf16.mxu0 0
        %2774 = vmatpush1.bf16.msra.mxu0 %v2639
        %2775 = vmatprep.subr.bf16.mxu0 0
        %2776 = vmatpush1.bf16.msra.mxu0 %v2638
        %2777 = vmatprep.subr.bf16.mxu0 0
        %2778 = vmatpush1.bf16.msra.mxu0 %v2637
        %2779 = vmatprep.subr.bf16.mxu0 0
        %2780 = vmatpush1.bf16.msra.mxu0 %v2636
        %2781 = vmatprep.subr.bf16.mxu0 0
        %2782 = vmatpush2.bf16.msra.mxu0 0
        %2783 = vmatprep.subr.bf16.mxu0 0
        %2784 = vmatpush2.bf16.msra.mxu0 0
        %2785 = vmatprep.subr.bf16.mxu0 0
        %2786 = vmatpush2.bf16.msra.mxu0 0
        %2787 = vmatprep.subr.bf16.mxu0 0
        %2788 = vmatpush2.bf16.msra.mxu0 0
        %2789 = vmatprep.subr.bf16.mxu0 0
        %2790 = vmatpush2.bf16.msra.mxu0 0
        %2791 = vmatprep.subr.bf16.mxu0 0
        %2792 = vmatpush2.bf16.msra.mxu0 0
        %2793 = vmatprep.subr.bf16.mxu0 0
        %2794 = vmatpush2.bf16.msra.mxu0 0
        %2795 = vmatprep.subr.bf16.mxu0 0
        %2796 = vmatpush2.bf16.msra.mxu0 0
        %2797 = vmatprep.mubr.bf16.mxu0 0
        %2798 = vmatmul.mubr.bf16.gmra.mxu0 %v2478
        %v2799 = vpop.f32.mrf.mxu0
        %v2800 = vadd.f32 %v2703, %v2799
        %v2801 = vpop.f32.mrf.mxu0
        %v2802 = vpop.f32.mrf.mxu0
        %v2803 = vadd.f32 %v2706, %v2802
        %v2804 = vpop.f32.mrf.mxu0
        %2805 = vmatprep.mubr.bf16.mxu0 0
        %2806 = vmatmul.mubr.bf16.gmra.mxu0 %v2481
        %v2807 = vpop.f32.mrf.mxu0
        %v2808 = vadd.f32 %v2711, %v2807
        %v2809 = vpop.f32.mrf.mxu0
        %v2810 = vpop.f32.mrf.mxu0
        %v2811 = vadd.f32 %v2714, %v2810
        %v2812 = vpop.f32.mrf.mxu0
        %2813 = vmatprep.mubr.bf16.mxu0 0
        %2814 = vmatmul.mubr.bf16.gmra.mxu0 %v2484
        %v2815 = vpop.f32.mrf.mxu0
        %v2816 = vadd.f32 %v2719, %v2815
        %v2817 = vpop.f32.mrf.mxu0
        %v2818 = vpop.f32.mrf.mxu0
        %v2819 = vadd.f32 %v2722, %v2818
        %v2820 = vpop.f32.mrf.mxu0
        %2821 = vmatprep.mubr.bf16.mxu0 0
        %2822 = vmatmul.mubr.bf16.gmra.mxu0 %v2487
        %v2823 = vpop.f32.mrf.mxu0
        %v2824 = vadd.f32 %v2727, %v2823
        %v2825 = vpop.f32.mrf.mxu0
        %v2826 = vpop.f32.mrf.mxu0
        %v2827 = vadd.f32 %v2730, %v2826
        %v2828 = vpop.f32.mrf.mxu0
        %2829 = vmatprep.mubr.bf16.mxu0 0
        %2830 = vmatmul.mubr.bf16.gmra.mxu0 %v2490
        %v2831 = vpop.f32.mrf.mxu0
        %v2832 = vadd.f32 %v2735, %v2831
        %v2833 = vpop.f32.mrf.mxu0
        %v2834 = vpop.f32.mrf.mxu0
        %v2835 = vadd.f32 %v2738, %v2834
        %v2836 = vpop.f32.mrf.mxu0
        %2837 = vmatprep.mubr.bf16.mxu0 0
        %2838 = vmatmul.mubr.bf16.gmra.mxu0 %v2493
        %v2839 = vpop.f32.mrf.mxu0
        %v2840 = vadd.f32 %v2743, %v2839
        %v2841 = vpop.f32.mrf.mxu0
        %v2842 = vpop.f32.mrf.mxu0
        %v2843 = vadd.f32 %v2746, %v2842
        %v2844 = vpop.f32.mrf.mxu0
        %2845 = vmatprep.mubr.bf16.mxu0 0
        %2846 = vmatmul.mubr.bf16.gmra.mxu0 %v2496
        %v2847 = vpop.f32.mrf.mxu0
        %v2848 = vadd.f32 %v2751, %v2847
        %v2849 = vpop.f32.mrf.mxu0
        %v2850 = vpop.f32.mrf.mxu0
        %v2851 = vadd.f32 %v2754, %v2850
        %v2852 = vpop.f32.mrf.mxu0
        %2853 = vmatprep.mubr.bf16.mxu0 0
        %2854 = vmatmul.mubr.bf16.gmra.mxu0 %v2499
        %v2855 = vpop.f32.mrf.mxu0
        %v2856 = vadd.f32 %v2759, %v2855
        %v2857 = vpop.f32.mrf.mxu0
        %v2858 = vpop.f32.mrf.mxu0
        %v2859 = vadd.f32 %v2762, %v2858
        %v2860 = vpop.f32.mrf.mxu0
        %2861 = vdwg.mxu0
        %v2862 = vadd.f32 %v2253, %v2800
        %v2863 = vadd.f32 %v2256, %v2803
        %v2864 = vadd.f32 %v2261, %v2808
        %v2865 = vadd.f32 %v2264, %v2811
        %v2866 = vadd.f32 %v2269, %v2816
        %v2867 = vadd.f32 %v2272, %v2819
        %v2868 = vadd.f32 %v2277, %v2824
        %v2869 = vadd.f32 %v2280, %v2827
        %v2870 = vadd.f32 %v2285, %v2832
        %v2871 = vadd.f32 %v2288, %v2835
        %v2872 = vadd.f32 %v2293, %v2840
        %v2873 = vadd.f32 %v2296, %v2843
        %v2874 = vadd.f32 %v2301, %v2848
        %v2875 = vadd.f32 %v2304, %v2851
        %v2876 = vadd.f32 %v2309, %v2856
        %v2877 = vadd.f32 %v2312, %v2859
        %v2878 = vadd.f32 %v2862, %v2863
        %v2879 = vadd.f32 %v2878, %v2864
        %v2880 = vadd.f32 %v2879, %v2865
        %v2881 = vadd.f32 %v2880, %v2866
        %v2882 = vadd.f32 %v2881, %v2867
        %v2883 = vadd.f32 %v2882, %v2868
        %v2884 = vadd.f32 %v2883, %v2869
        %v2885 = vadd.f32 %v2884, %v2870
        %v2886 = vadd.f32 %v2885, %v2871
        %v2887 = vadd.f32 %v2886, %v2872
        %v2888 = vadd.f32 %v2887, %v2873
        %v2889 = vadd.f32 %v2888, %v2874
        %v2890 = vadd.f32 %v2889, %v2875
        %v2891 = vadd.f32 %v2890, %v2876
        %v2892 = vadd.f32 %v2891, %v2877
        %v2893 = vrot.slane %v2892, 4
        %v2894 = vadd.f32 %v2892, %v2893
        %v2895 = vrot.slane %v2894, 2
        %v2896 = vadd.f32 %v2894, %v2895
        %v2897 = vrot.slane %v2896, 1
        %v2898 = vadd.f32 %v2896, %v2897
        %2899 = vst [vmem:[%s480] sm:$0x1] %v2898
        %v2900 = vmul.f32 %v2862, %v2862
        %v2901 = vmul.f32 %v2863, %v2863
        %v2902 = vmul.f32 %v2864, %v2864
        %v2903 = vmul.f32 %v2865, %v2865
        %v2904 = vmul.f32 %v2866, %v2866
        %v2905 = vmul.f32 %v2867, %v2867
        %v2906 = vmul.f32 %v2868, %v2868
        %v2907 = vmul.f32 %v2869, %v2869
        %v2908 = vmul.f32 %v2870, %v2870
        %v2909 = vmul.f32 %v2871, %v2871
        %v2910 = vmul.f32 %v2872, %v2872
        %v2911 = vmul.f32 %v2873, %v2873
        %v2912 = vmul.f32 %v2874, %v2874
        %v2913 = vmul.f32 %v2875, %v2875
        %v2914 = vmul.f32 %v2876, %v2876
        %v2915 = vmul.f32 %v2877, %v2877
        %v2916 = vadd.f32 %v2900, %v2901
        %v2917 = vadd.f32 %v2916, %v2902
        %v2918 = vadd.f32 %v2917, %v2903
        %v2919 = vadd.f32 %v2918, %v2904
        %v2920 = vadd.f32 %v2919, %v2905
        %v2921 = vadd.f32 %v2920, %v2906
        %v2922 = vadd.f32 %v2921, %v2907
        %v2923 = vadd.f32 %v2922, %v2908
        %v2924 = vadd.f32 %v2923, %v2909
        %v2925 = vadd.f32 %v2924, %v2910
        %v2926 = vadd.f32 %v2925, %v2911
        %v2927 = vadd.f32 %v2926, %v2912
        %v2928 = vadd.f32 %v2927, %v2913
        %v2929 = vadd.f32 %v2928, %v2914
        %v2930 = vadd.f32 %v2929, %v2915
        %v2931 = vrot.slane %v2930, 4
        %v2932 = vadd.f32 %v2930, %v2931
        %v2933 = vrot.slane %v2932, 2
        %v2934 = vadd.f32 %v2932, %v2933
        %v2935 = vrot.slane %v2934, 1
        %v2936 = vadd.f32 %v2934, %v2935
        %2937 = vst [vmem:[%s486] sm:$0x1] %v2936
        %v2938 = vpack.c.bf16 %v2863, %v2862
        %v2939 = vpack.c.bf16 %v2865, %v2864
        %v2940 = vpack.c.bf16 %v2867, %v2866
        %v2941 = vpack.c.bf16 %v2869, %v2868
        %v2942 = vpack.c.bf16 %v2871, %v2870
        %v2943 = vpack.c.bf16 %v2873, %v2872
        %v2944 = vpack.c.bf16 %v2875, %v2874
        %v2945 = vpack.c.bf16 %v2877, %v2876
        %v2954 = vunpack.c.l.b16 %v2938
        %v2955 = vunpack.c.h.b16 %v2938
        %v2956 = vunpack.c.l.b16 %v2939
        %v2957 = vunpack.c.h.b16 %v2939
        %v2958 = vunpack.c.l.b16 %v2940
        %v2959 = vunpack.c.h.b16 %v2940
        %v2960 = vunpack.c.l.b16 %v2941
        %v2961 = vunpack.c.h.b16 %v2941
        %v2962 = vunpack.c.l.b16 %v2942
        %v2963 = vunpack.c.h.b16 %v2942
        %v2964 = vunpack.c.l.b16 %v2943
        %v2965 = vunpack.c.h.b16 %v2943
        %v2966 = vunpack.c.l.b16 %v2944
        %v2967 = vunpack.c.h.b16 %v2944
        %v2968 = vunpack.c.l.b16 %v2945
        %v2969 = vunpack.c.h.b16 %v2945
        %v2970 = vpack.c.b16 %v2954, %v2954
        %v2971 = vpack.c.b16 %v2955, %v2955
        %v2972 = vpack.c.b16 %v2956, %v2956
        %v2973 = vpack.c.b16 %v2957, %v2957
        %v2974 = vpack.c.b16 %v2958, %v2958
        %v2975 = vpack.c.b16 %v2959, %v2959
        %v2976 = vpack.c.b16 %v2960, %v2960
        %v2977 = vpack.c.b16 %v2961, %v2961
        %v2978 = vpack.c.b16 %v2962, %v2962
        %v2979 = vpack.c.b16 %v2963, %v2963
        %v2980 = vpack.c.b16 %v2964, %v2964
        %v2981 = vpack.c.b16 %v2965, %v2965
        %v2982 = vpack.c.b16 %v2966, %v2966
        %v2983 = vpack.c.b16 %v2967, %v2967
        %v2984 = vpack.c.b16 %v2968, %v2968
        %v2985 = vpack.c.b16 %v2969, %v2969
        %3002 = vst [vmem:[%s474] sm:$0xf] %v2970
        %3003 = vst [vmem:[%s474 + $0x4] sm:$0xf] %v2971
        %3004 = vst [vmem:[%s474 + $0x8] sm:$0xf] %v2972
        %3005 = vst [vmem:[%s474 + $0xc] sm:$0xf] %v2973
        %3006 = vst [vmem:[%s474 + $0x10] sm:$0xf] %v2974
        %3007 = vst [vmem:[%s474 + $0x14] sm:$0xf] %v2975
        %3008 = vst [vmem:[%s474 + $0x18] sm:$0xf] %v2976
        %3009 = vst [vmem:[%s474 + $0x1c] sm:$0xf] %v2977
        %3010 = vst [vmem:[%s474 + $0x20] sm:$0xf] %v2978
        %3011 = vst [vmem:[%s474 + $0x24] sm:$0xf] %v2979
        %3012 = vst [vmem:[%s474 + $0x28] sm:$0xf] %v2980
        %3013 = vst [vmem:[%s474 + $0x2c] sm:$0xf] %v2981
        %3014 = vst [vmem:[%s474 + $0x30] sm:$0xf] %v2982
        %3015 = vst [vmem:[%s474 + $0x34] sm:$0xf] %v2983
        %3016 = vst [vmem:[%s474 + $0x38] sm:$0xf] %v2984
        %3017 = vst [vmem:[%s474 + $0x3c] sm:$0xf] %v2985
        %s3018 = sand.u32 %s218, 1
        %s3019 = scalar_lea.sflag [#allocation6], %s3018
        %s3020 = sand.u32 %s218, 1
        %s3021 = smul.addr %s3020, 64
        %s3022 = scalar_lea.vmem [#allocation12], %s3021
        %s3023 = sand.u32 %s33, 1
        %s3024 = scalar_lea.sflag [#allocation14], %s3023
        %s3025 = sand.u32 %s246, 1
        %s3026 = scalar_lea.vmem [#allocation13], %s3025
        %s3027 = sand.u32 %s33, 1
        %s3028 = scalar_lea.sflag [#allocation14], %s3027
        %s3029 = sand.u32 %s274, 1
        %s3030 = scalar_lea.vmem [#allocation15], %s3029
        // Predicated region
        $region69: #{tpu_custom_call.1} parent=43 // pred_check
          %p3031 = pneg %p228
        $region70: #{tpu_custom_call.1} parent=43 // pred_check_branch
          %3033 = sbr.rel (%p3031) target = $region72
        $region71: #{tpu_custom_call.1} parent=43 // pred_region
          %s3034 = smul.u32 8, %s38
          %s3036 = ssub.s32 1024, 1024
          %3037 = vsyncadd %s3019, %s3036
          %s3038 = smul.addr %s3034, 2
          %s3039 = smul.addr %s37, 32
          %s3040 = sadd.s32 %s3038, %s3039
          %s3041 = smul.addr %s3040, 64
          %s3042 = scalar_lea.hbm %s6, %s3041
          %s3043 = sshll.u32 %s3022, 4
          %s3044 = int_to_ptr.vmem [resolvable:$true] %s3043
          %3049 = dma.vmem_to_hbm [thread:$0]  %s3044, 1024, %s3042, %s3019, 64, 64, 4
        $region72: #{tpu_custom_call.1} parent=43 // pred_fallthru
          _
        // Predicated region
        $region73: #{tpu_custom_call.1} parent=43 // pred_check
          %p3050 = pneg %p256
        $region74: #{tpu_custom_call.1} parent=43 // pred_check_branch
          %3052 = sbr.rel (%p3050) target = $region76
        $region75: #{tpu_custom_call.1} parent=43 // pred_region
          %s3054 = ssub.s32 16, 16
          %3055 = vsyncadd %s3024, %s3054
          %s3056 = smul.addr %s37, 2
          %s3057 = sadd.s32 %s38, %s3056
          %s3058 = smul.addr %s3057, 16
          %s3059 = scalar_lea.hbm %s7, %s3058
          %s3061 = sshll.u32 %s3026, 4
          %s3062 = int_to_ptr.vmem [resolvable:$true] %s3061
          %3064 = dma.vmem_to_hbm [thread:$0]  %s3062, 16, %s3059, %s3024
        $region76: #{tpu_custom_call.1} parent=43 // pred_fallthru
          _
        // Predicated region
        $region77: #{tpu_custom_call.1} parent=43 // pred_check
          %p3065 = pneg %p284
        $region78: #{tpu_custom_call.1} parent=43 // pred_check_branch
          %3067 = sbr.rel (%p3065) target = $region80
        $region79: #{tpu_custom_call.1} parent=43 // pred_region
          %s3069 = ssub.s32 16, 16
          %3070 = vsyncadd %s3028, %s3069
          %s3071 = smul.addr %s37, 2
          %s3072 = sadd.s32 %s38, %s3071
          %s3073 = smul.addr %s3072, 16
          %s3074 = scalar_lea.hbm %s8, %s3073
          %s3076 = sshll.u32 %s3030, 4
          %s3077 = int_to_ptr.vmem [resolvable:$true] %s3076
          %3079 = dma.vmem_to_hbm [thread:$0]  %s3077, 16, %s3074, %s3028
        $region80: #{tpu_custom_call.1} parent=43 // pred_fallthru
          _
      $region44: #{tpu_custom_call.1} parent=5 // pred_fallthru
        _
      %p3080 = scmp.le.s32.totalorder 2, %s28
      // Predicated region
      $region81: #{tpu_custom_call.1} parent=5 // pred_check
        %p3081 = pneg %p3080
      $region82: #{tpu_custom_call.1} parent=5 // pred_check_branch
        %3083 = sbr.rel (%p3081) target = $region84
      $region83: #{tpu_custom_call.1} parent=5 // pred_region
        %s3084 = ssub.s32 %s28, 2
        // Predicated region
        $region85: #{tpu_custom_call.1} parent=83 // pred_check
          %p3085 = pneg %p234
        $region86: #{tpu_custom_call.1} parent=83 // pred_check_branch
          %3087 = sbr.rel (%p3085) target = $region88
        $region87: #{tpu_custom_call.1} parent=83 // pred_region
          %s3088 = sand.u32 %s219, 1
          %s3089 = scalar_lea.sflag [#allocation6], %s3088
          %s3090 = sand.u32 %s219, 1
          %s3091 = smul.addr %s3090, 64
          %s3092 = scalar_lea.vmem [#allocation12], %s3091
          %3093 = dma.done %s3089, 1024
        $region88: #{tpu_custom_call.1} parent=83 // pred_fallthru
          _
        // Predicated region
        $region89: #{tpu_custom_call.1} parent=83 // pred_check
          %p3094 = pneg %p262
        $region90: #{tpu_custom_call.1} parent=83 // pred_check_branch
          %3096 = sbr.rel (%p3094) target = $region92
        $region91: #{tpu_custom_call.1} parent=83 // pred_region
          %s3097 = sand.u32 %s34, 1
          %s3098 = scalar_lea.sflag [#allocation14], %s3097
          %s3099 = sand.u32 %s247, 1
          %s3100 = scalar_lea.vmem [#allocation13], %s3099
          %3101 = dma.done %s3098, 16
        $region92: #{tpu_custom_call.1} parent=83 // pred_fallthru
          _
        // Predicated region
        $region93: #{tpu_custom_call.1} parent=83 // pred_check
          %p3102 = pneg %p290
        $region94: #{tpu_custom_call.1} parent=83 // pred_check_branch
          %3104 = sbr.rel (%p3102) target = $region96
        $region95: #{tpu_custom_call.1} parent=83 // pred_region
          %s3105 = sand.u32 %s34, 1
          %s3106 = scalar_lea.sflag [#allocation14], %s3105
          %s3107 = sand.u32 %s275, 1
          %s3108 = scalar_lea.vmem [#allocation15], %s3107
          %3109 = dma.done %s3106, 16
        $region96: #{tpu_custom_call.1} parent=83 // pred_fallthru
          _
      $region84: #{tpu_custom_call.1} parent=5 // pred_fallthru
        _
    $region6: #{tpu_custom_call.1} parent=1 // loop_footer
      %s32 = sadd.s32 1, %s28
    $region7: #{tpu_custom_call.1} parent=1 // loop_footer_branch
      %27 = sbr.rel target = $region3
    $region8: #{tpu_custom_call.1} parent=1 // loop_exit
      _
    %3110 = vsyncpa [#allocation5], 1
    %s3111 = scalar_lea.sflag [#allocation5], 1
    %3112 = vsyncpa %s3111, 1
    %3113 = vsyncpa [#allocation8], 1
    %s3114 = scalar_lea.sflag [#allocation8], 1
    %3115 = vsyncpa %s3114, 1
    %3116 = vsyncpa [#allocation11], 1
    %3117 = vsyncpa [#allocation6], 1
    %s3118 = scalar_lea.sflag [#allocation6], 1
    %3119 = vsyncpa %s3118, 1
    %3120 = vsyncpa [#allocation14], 1
    %s3121 = scalar_lea.sflag [#allocation14], 1
    %3122 = vsyncpa %s3121, 1

</llo_original>
